<compile_context>
chip_gen: v7x
topology: tpu7x:2x2x1
jax: 0.10.0
libtpu: 0.0.40
codegen_flags: <defaults>
</compile_context>

<pallas_src>
import functools
import math

import jax
import jax.numpy as jnp
from jax.experimental import pallas as pl
from jax.experimental.pallas import tpu as pltpu


# ----------------------------- Pallas kernel --------------------------------
def cbam_kernel(x_ref, w1_ref, w2_ref, wsp_ref, dxmask_ref, out_ref,
                ext_ref, pool_ref, *, width, ksize):
    """Single fused step over the whole (B, C, N) batch.

    x_ref      : (B, C, N)      input, N = H*W flattened (lane-dense)
    w1_ref     : (Crp, C)       fc1 weight (hidden dim zero-padded, exact)
    w2_ref     : (C, Crp)       fc2 weight
    wsp_ref    : (2B, k*k)      conv taps; rows [0:B] avg-channel, [B:2B] max-channel
    dxmask_ref : (k, N)         horizontal (dx) validity masks over flattened N
    out_ref    : (B, C, N)      output
    ext_ref    : (2B, N + 2*pad) zero-extended spatial maps (VMEM scratch)
    pool_ref   : (C, 2B)        pooled columns for the channel MLP (VMEM scratch)
    """
    B, C, N = x_ref.shape
    half = ksize // 2
    pad = half * width + half
    inv_n = 1.0 / N
    inv_c = 1.0 / C

    # ---------------- channel attention: pooling ----------------
    # Column layout (C, 2B): col b = avg-pool of batch b, col B+b = max-pool.
    for b in range(B):
        xb = x_ref[b]                                                   # (C, N)
        pool_ref[:, b:b + 1] = jnp.sum(xb, axis=1, keepdims=True) * inv_n
        pool_ref[:, B + b:B + b + 1] = jnp.max(xb, axis=1, keepdims=True)

    # One fc1 matmul over all 2B pooled columns; fc2 fused via linearity.
    h = jnp.dot(w1_ref[...], pool_ref[...],
                preferred_element_type=jnp.float32)                     # (Crp, 2B)
    hr = jnp.maximum(h, 0.0)
    hsum = hr[:, 0:B] + hr[:, B:2 * B]                                  # (Crp, B)
    ca_logit = jnp.dot(w2_ref[...], hsum,
                       preferred_element_type=jnp.float32)              # (C, B)
    ca = 0.5 * jnp.tanh(0.5 * ca_logit) + 0.5                           # exact sigmoid

    # -------- apply channel attention; build zero-extended spatial maps --------
    ext_ref[...] = jnp.zeros(ext_ref.shape, jnp.float32)
    x_ca = []
    for b in range(B):
        xc = x_ref[b] * ca[:, b:b + 1]                                  # (C, N)
        x_ca.append(xc)
        ext_ref[b:b + 1, pad:pad + N] = (
            jnp.sum(xc, axis=0, keepdims=True) * inv_c)                 # mean over C
        ext_ref[B + b:B + b + 1, pad:pad + N] = (
            jnp.max(xc, axis=0, keepdims=True))                         # max over C

    # -------- 7x7 "same" conv as 49-tap shift-and-accumulate (VPU only) --------
    # For output position p = h*W + w and tap (dy, dx), the input sample sits at
    # flattened index p + dy*W + dx.  Out-of-range rows fall into the zero
    # padding of ext_ref; out-of-range columns are killed by the dx mask.
    masks = [dxmask_ref[j:j + 1, :] for j in range(ksize)]              # (1, N) each
    acc = jnp.zeros((2 * B, N), jnp.float32)
    t = 0
    for dy in range(-half, half + 1):
        for dx in range(-half, half + 1):
            start = pad + dy * width + dx
            shifted = ext_ref[:, start:start + N]                       # (2B, N)
            wcol = wsp_ref[:, t:t + 1]                                  # (2B, 1)
            acc = acc + (shifted * masks[dx + half]) * wcol
            t += 1

    sa_logit = acc[0:B] + acc[B:2 * B]                                  # (B, N)
    sa = 0.5 * jnp.tanh(0.5 * sa_logit) + 0.5                           # exact sigmoid

    # ---------------- final elementwise scale + store ----------------
    for b in range(B):
        out_ref[b] = (x_ca[b] * sa[b:b + 1, :]).astype(out_ref.dtype)


# ------------------------------ wrapper --------------------------------------
def cbam(x, params):
    """x: (B, C, H, W) float32.  params from make_params()."""
    B, C, H, W = x.shape
    N = H * W
    ksize = params["kernel_size"]
    half = ksize // 2
    pad = half * W + half

    x_flat = x.reshape(B, C, N)                     # free, contiguous
    w1p, w2p, wconv = params["w1p"], params["w2p"], params["wconv"]

    # Conv taps replicated per batch row: rows [0:B] use the avg-channel weights,
    # rows [B:2B] the max-channel weights (matches torch.cat([avg, max], dim=1)).
    k_avg = wconv[0, 0].reshape(1, -1)              # (1, k*k)
    k_max = wconv[0, 1].reshape(1, -1)
    wsp = jnp.concatenate(
        [jnp.tile(k_avg, (B, 1)), jnp.tile(k_max, (B, 1))], axis=0)     # (2B, k*k)

    # Horizontal validity masks over the flattened spatial axis, one per dx.
    wpos = jnp.arange(N, dtype=jnp.int32) % W
    dxmask = jnp.stack(
        [((wpos + dx >= 0) & (wpos + dx < W)).astype(jnp.float32)
         for dx in range(-half, half + 1)], axis=0)                     # (k, N)

    kernel = functools.partial(cbam_kernel, width=W, ksize=ksize)

    vmem_spec = lambda: pl.BlockSpec(memory_space=pltpu.MemorySpace.VMEM)
    out = pl.pallas_call(
        kernel,
        out_shape=jax.ShapeDtypeStruct((B, C, N), jnp.float32),
        in_specs=[vmem_spec() for _ in range(5)],
        out_specs=vmem_spec(),
        scratch_shapes=[
            pltpu.VMEM((2 * B, N + 2 * pad), jnp.float32),   # zero-extended maps
            pltpu.VMEM((C, 2 * B), jnp.float32),             # pooled MLP columns
        ],
    )(x_flat, w1p, w2p, wsp, dxmask)
    return out.reshape(B, C, H, W)


# ----------------------- parameter construction (glue) -----------------------
def make_params(key, c, ratio, kernel_size=7):
    kr = max(1, c // ratio)
    k1, k2, k3 = jax.random.split(key, 3)
    w1 = jax.random.normal(k1, (kr, c), jnp.float32) * (1.0 / math.sqrt(c))
    w2 = jax.random.normal(k2, (c, kr), jnp.float32) * (1.0 / math.sqrt(kr))
    wconv = jax.random.normal(
        k3, (1, 2, kernel_size, kernel_size), jnp.float32
    ) * (1.0 / math.sqrt(2 * kernel_size * kernel_size))

    # Zero-pad the MLP hidden dim to a sublane multiple (numerically exact:
    # relu(0)=0 and the matching fc2 columns are zero).
    crp = max(8, ((kr + 7) // 8) * 8)
    w1p = jnp.zeros((crp, c), jnp.float32).at[:kr].set(w1)
    w2p = jnp.zeros((c, crp), jnp.float32).at[:, :kr].set(w2)

    return {"w1": w1, "w2": w2, "wconv": wconv, "w1p": w1p, "w2p": w2p,
            "kernel_size": kernel_size}


# ------------------------------ reference ------------------------------------
def cbam_ref(x, p):
    w1, w2, wconv = p["w1"], p["w2"], p["wconv"]
    half = p["kernel_size"] // 2
    # Channel attention
    avg = jnp.mean(x, axis=(2, 3))                         # (B, C)
    mx = jnp.max(x, axis=(2, 3))                           # (B, C)

    def mlp(v):
        return jax.nn.relu(v @ w1.T) @ w2.T                # (B, C)

    ca = jax.nn.sigmoid(mlp(avg) + mlp(mx))[:, :, None, None]
    x1 = x * ca
    # Spatial attention
    avg_s = jnp.mean(x1, axis=1, keepdims=True)            # (B, 1, H, W)
    max_s = jnp.max(x1, axis=1, keepdims=True)             # (B, 1, H, W)
    cat = jnp.concatenate([avg_s, max_s], axis=1)          # (B, 2, H, W)
    logits = jax.lax.conv_general_dilated(
        cat, wconv, window_strides=(1, 1),
        padding=((half, half), (half, half)),
        dimension_numbers=("NCHW", "OIHW", "NCHW"))
    sa = jax.nn.sigmoid(logits)                            # (B, 1, H, W)
    return x1 * sa


# -------------------------------- main ----------------------------------------
if __name__ == "__main__":
    B, C, H, W = 2, 32, 16, 16
    ratio = 8          # CBAM default
    key = jax.random.PRNGKey(0)
    kx, kp = jax.random.split(key)
    x = jax.random.normal(kx, (B, C, H, W), jnp.float32)
    params = make_params(kp, C, ratio)

    out = cbam(x, params)
    jax.block_until_ready(out)

    ref = cbam_ref(x, params)
    # Sigmoids are exact now; the residual difference comes from MXU default
    # matmul precision in the tiny channel MLP and the reference conv path.
    assert jnp.allclose(out, ref, atol=5e-3, rtol=5e-3), (
        "CBAM kernel mismatch, max abs err = "
        + str(float(jnp.max(jnp.abs(out - ref)))))

    print("KERNEL_OK")
</pallas_src>

<mosaic_0001>
module attributes {stable_mosaic.version = 11 : i64} {
  func.func @cbam_kernel(%arg0: memref<2x32x256xf32, #tpu.memory_space<vmem>>, %arg1: memref<8x32xf32, #tpu.memory_space<vmem>>, %arg2: memref<32x8xf32, #tpu.memory_space<vmem>>, %arg3: memref<4x49xf32, #tpu.memory_space<vmem>>, %arg4: memref<7x256xf32, #tpu.memory_space<vmem>>, %arg5: memref<2x32x256xf32, #tpu.memory_space<vmem>>, %arg6: memref<4x358xf32, #tpu.memory_space<vmem>>, %arg7: memref<32x4xf32, #tpu.memory_space<vmem>>) attributes {dimension_semantics = [], scalar_prefetch = 0 : i64, scratch_operands = 2 : i64, tpu.core_type = #tpu.core_type<tc>} {
    %c0 = arith.constant 0 : index
    %c0_0 = arith.constant 0 : index
    %c0_1 = arith.constant 0 : index
    %0 = vector.load %arg0[%c0, %c0_0, %c0_1] : memref<2x32x256xf32, #tpu.memory_space<vmem>>, vector<1x32x256xf32>
    %1 = vector.shape_cast %0 : vector<1x32x256xf32> to vector<32x256xf32>
    %cst = arith.constant dense<0.000000e+00> : vector<32xf32>
    %2 = vector.multi_reduction <add>, %1, %cst [1] : vector<32x256xf32> to vector<32xf32>
    %3 = vector.shape_cast %2 : vector<32xf32> to vector<32x1xf32>
    %cst_2 = arith.constant 3.906250e-03 : f32
    %4 = vector.broadcast %cst_2 : f32 to vector<32x1xf32>
    %5 = arith.mulf %3, %4 : vector<32x1xf32>
    %c0_3 = arith.constant 0 : index
    %c0_4 = arith.constant 0 : index
    %6 = vector.load %arg7[%c0_3, %c0_4] : memref<32x4xf32, #tpu.memory_space<vmem>>, vector<32x1xf32>
    tpu.vector_store %arg7[%c0_3, %c0_4], %5 {strides = array<i32>} : memref<32x4xf32, #tpu.memory_space<vmem>>, vector<32x1xf32>,
    %cst_5 = arith.constant dense<0xFF800000> : vector<32xf32>
    %7 = vector.multi_reduction <maximumf>, %1, %cst_5 [1] : vector<32x256xf32> to vector<32xf32>
    %8 = vector.shape_cast %7 : vector<32xf32> to vector<32x1xf32>
    %c0_6 = arith.constant 0 : index
    %c2 = arith.constant 2 : index
    %9 = vector.load %arg7[%c0_6, %c2] : memref<32x4xf32, #tpu.memory_space<vmem>>, vector<32x1xf32>
    tpu.vector_store %arg7[%c0_6, %c2], %8 {strides = array<i32>} : memref<32x4xf32, #tpu.memory_space<vmem>>, vector<32x1xf32>,
    %c1 = arith.constant 1 : index
    %c0_7 = arith.constant 0 : index
    %c0_8 = arith.constant 0 : index
    %10 = vector.load %arg0[%c1, %c0_7, %c0_8] : memref<2x32x256xf32, #tpu.memory_space<vmem>>, vector<1x32x256xf32>
    %11 = vector.shape_cast %10 : vector<1x32x256xf32> to vector<32x256xf32>
    %cst_9 = arith.constant dense<0.000000e+00> : vector<32xf32>
    %12 = vector.multi_reduction <add>, %11, %cst_9 [1] : vector<32x256xf32> to vector<32xf32>
    %13 = vector.shape_cast %12 : vector<32xf32> to vector<32x1xf32>
    %cst_10 = arith.constant 3.906250e-03 : f32
    %14 = vector.broadcast %cst_10 : f32 to vector<32x1xf32>
    %15 = arith.mulf %13, %14 : vector<32x1xf32>
    %c0_11 = arith.constant 0 : index
    %c1_12 = arith.constant 1 : index
    %16 = vector.load %arg7[%c0_11, %c1_12] : memref<32x4xf32, #tpu.memory_space<vmem>>, vector<32x1xf32>
    tpu.vector_store %arg7[%c0_11, %c1_12], %15 {strides = array<i32>} : memref<32x4xf32, #tpu.memory_space<vmem>>, vector<32x1xf32>,
    %cst_13 = arith.constant dense<0xFF800000> : vector<32xf32>
    %17 = vector.multi_reduction <maximumf>, %11, %cst_13 [1] : vector<32x256xf32> to vector<32xf32>
    %18 = vector.shape_cast %17 : vector<32xf32> to vector<32x1xf32>
    %c0_14 = arith.constant 0 : index
    %c3 = arith.constant 3 : index
    %19 = vector.load %arg7[%c0_14, %c3] : memref<32x4xf32, #tpu.memory_space<vmem>>, vector<32x1xf32>
    tpu.vector_store %arg7[%c0_14, %c3], %18 {strides = array<i32>} : memref<32x4xf32, #tpu.memory_space<vmem>>, vector<32x1xf32>,
    %c0_15 = arith.constant 0 : index
    %c0_16 = arith.constant 0 : index
    %20 = vector.load %arg1[%c0_15, %c0_16] : memref<8x32xf32, #tpu.memory_space<vmem>>, vector<8x32xf32>
    %c0_17 = arith.constant 0 : index
    %c0_18 = arith.constant 0 : index
    %21 = vector.load %arg7[%c0_17, %c0_18] : memref<32x4xf32, #tpu.memory_space<vmem>>, vector<32x4xf32>
    %cst_19 = arith.constant dense<0.000000e+00> : vector<8x4xf32>
    %22 = tpu.matmul %20, %21, %cst_19 {dimension_numbers = #tpu.dot_dimension_numbers<[1], [0], [0], [1], [0, 0, 1, 1], [], []>} : vector<8x32xf32>, vector<32x4xf32>, vector<8x4xf32> -> vector<8x4xf32>
    %cst_20 = arith.constant 0.000000e+00 : f32
    %23 = vector.broadcast %cst_20 : f32 to vector<8x4xf32>
    %24 = arith.maximumf %22, %23 : vector<8x4xf32>
    %25 = vector.extract_strided_slice %24 {offsets = [0, 0], sizes = [8, 2], strides = [1, 1]} : vector<8x4xf32> to vector<8x2xf32>
    %26 = vector.extract_strided_slice %24 {offsets = [0, 2], sizes = [8, 2], strides = [1, 1]} : vector<8x4xf32> to vector<8x2xf32>
    %27 = arith.addf %25, %26 : vector<8x2xf32>
    %c0_21 = arith.constant 0 : index
    %c0_22 = arith.constant 0 : index
    %28 = vector.load %arg2[%c0_21, %c0_22] : memref<32x8xf32, #tpu.memory_space<vmem>>, vector<32x8xf32>
    %cst_23 = arith.constant dense<0.000000e+00> : vector<32x2xf32>
    %29 = tpu.matmul %28, %27, %cst_23 {dimension_numbers = #tpu.dot_dimension_numbers<[1], [0], [0], [1], [0, 0, 1, 1], [], []>} : vector<32x8xf32>, vector<8x2xf32>, vector<32x2xf32> -> vector<32x2xf32>
    %cst_24 = arith.constant 5.000000e-01 : f32
    %30 = vector.broadcast %cst_24 : f32 to vector<32x2xf32>
    %31 = arith.mulf %30, %29 : vector<32x2xf32>
    %32 = math.tanh %31 : vector<32x2xf32>
    %cst_25 = arith.constant 5.000000e-01 : f32
    %33 = vector.broadcast %cst_25 : f32 to vector<32x2xf32>
    %34 = arith.mulf %33, %32 : vector<32x2xf32>
    %cst_26 = arith.constant 5.000000e-01 : f32
    %35 = vector.broadcast %cst_26 : f32 to vector<32x2xf32>
    %36 = arith.addf %34, %35 : vector<32x2xf32>
    %cst_27 = arith.constant 0.000000e+00 : f32
    %37 = vector.broadcast %cst_27 : f32 to vector<4x358xf32>
    %c0_28 = arith.constant 0 : index
    %c0_29 = arith.constant 0 : index
    %38 = vector.load %arg6[%c0_28, %c0_29] : memref<4x358xf32, #tpu.memory_space<vmem>>, vector<4x358xf32>
    tpu.vector_store %arg6[%c0_28, %c0_29], %37 {strides = array<i32>} : memref<4x358xf32, #tpu.memory_space<vmem>>, vector<4x358xf32>,
    %c0_30 = arith.constant 0 : index
    %c0_31 = arith.constant 0 : index
    %c0_32 = arith.constant 0 : index
    %39 = vector.load %arg0[%c0_30, %c0_31, %c0_32] : memref<2x32x256xf32, #tpu.memory_space<vmem>>, vector<1x32x256xf32>
    %40 = vector.shape_cast %39 : vector<1x32x256xf32> to vector<32x256xf32>
    %41 = vector.extract_strided_slice %36 {offsets = [0, 0], sizes = [32, 1], strides = [1, 1]} : vector<32x2xf32> to vector<32x1xf32>
    %42 = vector.broadcast %41 : vector<32x1xf32> to vector<32x256xf32>
    %43 = arith.mulf %40, %42 : vector<32x256xf32>
    %cst_33 = arith.constant dense<0.000000e+00> : vector<256xf32>
    %44 = vector.multi_reduction <add>, %43, %cst_33 [0] : vector<32x256xf32> to vector<256xf32>
    %45 = vector.shape_cast %44 : vector<256xf32> to vector<1x256xf32>
    %cst_34 = arith.constant 3.125000e-02 : f32
    %46 = vector.broadcast %cst_34 : f32 to vector<1x256xf32>
    %47 = arith.mulf %45, %46 : vector<1x256xf32>
    %c0_35 = arith.constant 0 : index
    %c51 = arith.constant 51 : index
    %48 = vector.load %arg6[%c0_35, %c51] : memref<4x358xf32, #tpu.memory_space<vmem>>, vector<1x256xf32>
    tpu.vector_store %arg6[%c0_35, %c51], %47 {strides = array<i32>} : memref<4x358xf32, #tpu.memory_space<vmem>>, vector<1x256xf32>,
    %cst_36 = arith.constant dense<0xFF800000> : vector<256xf32>
    %49 = vector.multi_reduction <maximumf>, %43, %cst_36 [0] : vector<32x256xf32> to vector<256xf32>
    %50 = vector.shape_cast %49 : vector<256xf32> to vector<1x256xf32>
    %c2_37 = arith.constant 2 : index
    %c51_38 = arith.constant 51 : index
    %51 = vector.load %arg6[%c2_37, %c51_38] : memref<4x358xf32, #tpu.memory_space<vmem>>, vector<1x256xf32>
    tpu.vector_store %arg6[%c2_37, %c51_38], %50 {strides = array<i32>} : memref<4x358xf32, #tpu.memory_space<vmem>>, vector<1x256xf32>,
    %c1_39 = arith.constant 1 : index
    %c0_40 = arith.constant 0 : index
    %c0_41 = arith.constant 0 : index
    %52 = vector.load %arg0[%c1_39, %c0_40, %c0_41] : memref<2x32x256xf32, #tpu.memory_space<vmem>>, vector<1x32x256xf32>
    %53 = vector.shape_cast %52 : vector<1x32x256xf32> to vector<32x256xf32>
    %54 = vector.extract_strided_slice %36 {offsets = [0, 1], sizes = [32, 1], strides = [1, 1]} : vector<32x2xf32> to vector<32x1xf32>
    %55 = vector.broadcast %54 : vector<32x1xf32> to vector<32x256xf32>
    %56 = arith.mulf %53, %55 : vector<32x256xf32>
    %cst_42 = arith.constant dense<0.000000e+00> : vector<256xf32>
    %57 = vector.multi_reduction <add>, %56, %cst_42 [0] : vector<32x256xf32> to vector<256xf32>
    %58 = vector.shape_cast %57 : vector<256xf32> to vector<1x256xf32>
    %cst_43 = arith.constant 3.125000e-02 : f32
    %59 = vector.broadcast %cst_43 : f32 to vector<1x256xf32>
    %60 = arith.mulf %58, %59 : vector<1x256xf32>
    %c1_44 = arith.constant 1 : index
    %c51_45 = arith.constant 51 : index
    %61 = vector.load %arg6[%c1_44, %c51_45] : memref<4x358xf32, #tpu.memory_space<vmem>>, vector<1x256xf32>
    tpu.vector_store %arg6[%c1_44, %c51_45], %60 {strides = array<i32>} : memref<4x358xf32, #tpu.memory_space<vmem>>, vector<1x256xf32>,
    %cst_46 = arith.constant dense<0xFF800000> : vector<256xf32>
    %62 = vector.multi_reduction <maximumf>, %56, %cst_46 [0] : vector<32x256xf32> to vector<256xf32>
    %63 = vector.shape_cast %62 : vector<256xf32> to vector<1x256xf32>
    %c3_47 = arith.constant 3 : index
    %c51_48 = arith.constant 51 : index
    %64 = vector.load %arg6[%c3_47, %c51_48] : memref<4x358xf32, #tpu.memory_space<vmem>>, vector<1x256xf32>
    tpu.vector_store %arg6[%c3_47, %c51_48], %63 {strides = array<i32>} : memref<4x358xf32, #tpu.memory_space<vmem>>, vector<1x256xf32>,
    %c0_49 = arith.constant 0 : index
    %c0_50 = arith.constant 0 : index
    %65 = vector.load %arg4[%c0_49, %c0_50] : memref<7x256xf32, #tpu.memory_space<vmem>>, vector<1x256xf32>
    %c1_51 = arith.constant 1 : index
    %c0_52 = arith.constant 0 : index
    %66 = vector.load %arg4[%c1_51, %c0_52] : memref<7x256xf32, #tpu.memory_space<vmem>>, vector<1x256xf32>
    %c2_53 = arith.constant 2 : index
    %c0_54 = arith.constant 0 : index
    %67 = vector.load %arg4[%c2_53, %c0_54] : memref<7x256xf32, #tpu.memory_space<vmem>>, vector<1x256xf32>
    %c3_55 = arith.constant 3 : index
    %c0_56 = arith.constant 0 : index
    %68 = vector.load %arg4[%c3_55, %c0_56] : memref<7x256xf32, #tpu.memory_space<vmem>>, vector<1x256xf32>
    %c4 = arith.constant 4 : index
    %c0_57 = arith.constant 0 : index
    %69 = vector.load %arg4[%c4, %c0_57] : memref<7x256xf32, #tpu.memory_space<vmem>>, vector<1x256xf32>
    %c5 = arith.constant 5 : index
    %c0_58 = arith.constant 0 : index
    %70 = vector.load %arg4[%c5, %c0_58] : memref<7x256xf32, #tpu.memory_space<vmem>>, vector<1x256xf32>
    %c6 = arith.constant 6 : index
    %c0_59 = arith.constant 0 : index
    %71 = vector.load %arg4[%c6, %c0_59] : memref<7x256xf32, #tpu.memory_space<vmem>>, vector<1x256xf32>
    %cst_60 = arith.constant 0.000000e+00 : f32
    %72 = vector.broadcast %cst_60 : f32 to vector<4x256xf32>
    %c0_61 = arith.constant 0 : index
    %c0_62 = arith.constant 0 : index
    %73 = vector.load %arg6[%c0_61, %c0_62] : memref<4x358xf32, #tpu.memory_space<vmem>>, vector<4x256xf32>
    %c0_63 = arith.constant 0 : index
    %c0_64 = arith.constant 0 : index
    %74 = vector.load %arg3[%c0_63, %c0_64] : memref<4x49xf32, #tpu.memory_space<vmem>>, vector<4x1xf32>
    %75 = vector.broadcast %65 : vector<1x256xf32> to vector<4x256xf32>
    %76 = arith.mulf %73, %75 : vector<4x256xf32>
    %77 = vector.broadcast %74 : vector<4x1xf32> to vector<4x256xf32>
    %78 = arith.mulf %76, %77 : vector<4x256xf32>
    %79 = arith.addf %72, %78 : vector<4x256xf32>
    %c0_65 = arith.constant 0 : index
    %c1_66 = arith.constant 1 : index
    %80 = vector.load %arg6[%c0_65, %c1_66] : memref<4x358xf32, #tpu.memory_space<vmem>>, vector<4x256xf32>
    %c0_67 = arith.constant 0 : index
    %c1_68 = arith.constant 1 : index
    %81 = vector.load %arg3[%c0_67, %c1_68] : memref<4x49xf32, #tpu.memory_space<vmem>>, vector<4x1xf32>
    %82 = vector.broadcast %66 : vector<1x256xf32> to vector<4x256xf32>
    %83 = arith.mulf %80, %82 : vector<4x256xf32>
    %84 = vector.broadcast %81 : vector<4x1xf32> to vector<4x256xf32>
    %85 = arith.mulf %83, %84 : vector<4x256xf32>
    %86 = arith.addf %79, %85 : vector<4x256xf32>
    %c0_69 = arith.constant 0 : index
    %c2_70 = arith.constant 2 : index
    %87 = vector.load %arg6[%c0_69, %c2_70] : memref<4x358xf32, #tpu.memory_space<vmem>>, vector<4x256xf32>
    %c0_71 = arith.constant 0 : index
    %c2_72 = arith.constant 2 : index
    %88 = vector.load %arg3[%c0_71, %c2_72] : memref<4x49xf32, #tpu.memory_space<vmem>>, vector<4x1xf32>
    %89 = vector.broadcast %67 : vector<1x256xf32> to vector<4x256xf32>
    %90 = arith.mulf %87, %89 : vector<4x256xf32>
    %91 = vector.broadcast %88 : vector<4x1xf32> to vector<4x256xf32>
    %92 = arith.mulf %90, %91 : vector<4x256xf32>
    %93 = arith.addf %86, %92 : vector<4x256xf32>
    %c0_73 = arith.constant 0 : index
    %c3_74 = arith.constant 3 : index
    %94 = vector.load %arg6[%c0_73, %c3_74] : memref<4x358xf32, #tpu.memory_space<vmem>>, vector<4x256xf32>
    %c0_75 = arith.constant 0 : index
    %c3_76 = arith.constant 3 : index
    %95 = vector.load %arg3[%c0_75, %c3_76] : memref<4x49xf32, #tpu.memory_space<vmem>>, vector<4x1xf32>
    %96 = vector.broadcast %68 : vector<1x256xf32> to vector<4x256xf32>
    %97 = arith.mulf %94, %96 : vector<4x256xf32>
    %98 = vector.broadcast %95 : vector<4x1xf32> to vector<4x256xf32>
    %99 = arith.mulf %97, %98 : vector<4x256xf32>
    %100 = arith.addf %93, %99 : vector<4x256xf32>
    %c0_77 = arith.constant 0 : index
    %c4_78 = arith.constant 4 : index
    %101 = vector.load %arg6[%c0_77, %c4_78] : memref<4x358xf32, #tpu.memory_space<vmem>>, vector<4x256xf32>
    %c0_79 = arith.constant 0 : index
    %c4_80 = arith.constant 4 : index
    %102 = vector.load %arg3[%c0_79, %c4_80] : memref<4x49xf32, #tpu.memory_space<vmem>>, vector<4x1xf32>
    %103 = vector.broadcast %69 : vector<1x256xf32> to vector<4x256xf32>
    %104 = arith.mulf %101, %103 : vector<4x256xf32>
    %105 = vector.broadcast %102 : vector<4x1xf32> to vector<4x256xf32>
    %106 = arith.mulf %104, %105 : vector<4x256xf32>
    %107 = arith.addf %100, %106 : vector<4x256xf32>
    %c0_81 = arith.constant 0 : index
    %c5_82 = arith.constant 5 : index
    %108 = vector.load %arg6[%c0_81, %c5_82] : memref<4x358xf32, #tpu.memory_space<vmem>>, vector<4x256xf32>
    %c0_83 = arith.constant 0 : index
    %c5_84 = arith.constant 5 : index
    %109 = vector.load %arg3[%c0_83, %c5_84] : memref<4x49xf32, #tpu.memory_space<vmem>>, vector<4x1xf32>
    %110 = vector.broadcast %70 : vector<1x256xf32> to vector<4x256xf32>
    %111 = arith.mulf %108, %110 : vector<4x256xf32>
    %112 = vector.broadcast %109 : vector<4x1xf32> to vector<4x256xf32>
    %113 = arith.mulf %111, %112 : vector<4x256xf32>
    %114 = arith.addf %107, %113 : vector<4x256xf32>
    %c0_85 = arith.constant 0 : index
    %c6_86 = arith.constant 6 : index
    %115 = vector.load %arg6[%c0_85, %c6_86] : memref<4x358xf32, #tpu.memory_space<vmem>>, vector<4x256xf32>
    %c0_87 = arith.constant 0 : index
    %c6_88 = arith.constant 6 : index
    %116 = vector.load %arg3[%c0_87, %c6_88] : memref<4x49xf32, #tpu.memory_space<vmem>>, vector<4x1xf32>
    %117 = vector.broadcast %71 : vector<1x256xf32> to vector<4x256xf32>
    %118 = arith.mulf %115, %117 : vector<4x256xf32>
    %119 = vector.broadcast %116 : vector<4x1xf32> to vector<4x256xf32>
    %120 = arith.mulf %118, %119 : vector<4x256xf32>
    %121 = arith.addf %114, %120 : vector<4x256xf32>
    %c0_89 = arith.constant 0 : index
    %c16 = arith.constant 16 : index
    %122 = vector.load %arg6[%c0_89, %c16] : memref<4x358xf32, #tpu.memory_space<vmem>>, vector<4x256xf32>
    %c0_90 = arith.constant 0 : index
    %c7 = arith.constant 7 : index
    %123 = vector.load %arg3[%c0_90, %c7] : memref<4x49xf32, #tpu.memory_space<vmem>>, vector<4x1xf32>
    %124 = vector.broadcast %65 : vector<1x256xf32> to vector<4x256xf32>
    %125 = arith.mulf %122, %124 : vector<4x256xf32>
    %126 = vector.broadcast %123 : vector<4x1xf32> to vector<4x256xf32>
    %127 = arith.mulf %125, %126 : vector<4x256xf32>
    %128 = arith.addf %121, %127 : vector<4x256xf32>
    %c0_91 = arith.constant 0 : index
    %c17 = arith.constant 17 : index
    %129 = vector.load %arg6[%c0_91, %c17] : memref<4x358xf32, #tpu.memory_space<vmem>>, vector<4x256xf32>
    %c0_92 = arith.constant 0 : index
    %c8 = arith.constant 8 : index
    %130 = vector.load %arg3[%c0_92, %c8] : memref<4x49xf32, #tpu.memory_space<vmem>>, vector<4x1xf32>
    %131 = vector.broadcast %66 : vector<1x256xf32> to vector<4x256xf32>
    %132 = arith.mulf %129, %131 : vector<4x256xf32>
    %133 = vector.broadcast %130 : vector<4x1xf32> to vector<4x256xf32>
    %134 = arith.mulf %132, %133 : vector<4x256xf32>
    %135 = arith.addf %128, %134 : vector<4x256xf32>
    %c0_93 = arith.constant 0 : index
    %c18 = arith.constant 18 : index
    %136 = vector.load %arg6[%c0_93, %c18] : memref<4x358xf32, #tpu.memory_space<vmem>>, vector<4x256xf32>
    %c0_94 = arith.constant 0 : index
    %c9 = arith.constant 9 : index
    %137 = vector.load %arg3[%c0_94, %c9] : memref<4x49xf32, #tpu.memory_space<vmem>>, vector<4x1xf32>
    %138 = vector.broadcast %67 : vector<1x256xf32> to vector<4x256xf32>
    %139 = arith.mulf %136, %138 : vector<4x256xf32>
    %140 = vector.broadcast %137 : vector<4x1xf32> to vector<4x256xf32>
    %141 = arith.mulf %139, %140 : vector<4x256xf32>
    %142 = arith.addf %135, %141 : vector<4x256xf32>
    %c0_95 = arith.constant 0 : index
    %c19 = arith.constant 19 : index
    %143 = vector.load %arg6[%c0_95, %c19] : memref<4x358xf32, #tpu.memory_space<vmem>>, vector<4x256xf32>
    %c0_96 = arith.constant 0 : index
    %c10 = arith.constant 10 : index
    %144 = vector.load %arg3[%c0_96, %c10] : memref<4x49xf32, #tpu.memory_space<vmem>>, vector<4x1xf32>
    %145 = vector.broadcast %68 : vector<1x256xf32> to vector<4x256xf32>
    %146 = arith.mulf %143, %145 : vector<4x256xf32>
    %147 = vector.broadcast %144 : vector<4x1xf32> to vector<4x256xf32>
    %148 = arith.mulf %146, %147 : vector<4x256xf32>
    %149 = arith.addf %142, %148 : vector<4x256xf32>
    %c0_97 = arith.constant 0 : index
    %c20 = arith.constant 20 : index
    %150 = vector.load %arg6[%c0_97, %c20] : memref<4x358xf32, #tpu.memory_space<vmem>>, vector<4x256xf32>
    %c0_98 = arith.constant 0 : index
    %c11 = arith.constant 11 : index
    %151 = vector.load %arg3[%c0_98, %c11] : memref<4x49xf32, #tpu.memory_space<vmem>>, vector<4x1xf32>
    %152 = vector.broadcast %69 : vector<1x256xf32> to vector<4x256xf32>
    %153 = arith.mulf %150, %152 : vector<4x256xf32>
    %154 = vector.broadcast %151 : vector<4x1xf32> to vector<4x256xf32>
    %155 = arith.mulf %153, %154 : vector<4x256xf32>
    %156 = arith.addf %149, %155 : vector<4x256xf32>
    %c0_99 = arith.constant 0 : index
    %c21 = arith.constant 21 : index
    %157 = vector.load %arg6[%c0_99, %c21] : memref<4x358xf32, #tpu.memory_space<vmem>>, vector<4x256xf32>
    %c0_100 = arith.constant 0 : index
    %c12 = arith.constant 12 : index
    %158 = vector.load %arg3[%c0_100, %c12] : memref<4x49xf32, #tpu.memory_space<vmem>>, vector<4x1xf32>
    %159 = vector.broadcast %70 : vector<1x256xf32> to vector<4x256xf32>
    %160 = arith.mulf %157, %159 : vector<4x256xf32>
    %161 = vector.broadcast %158 : vector<4x1xf32> to vector<4x256xf32>
    %162 = arith.mulf %160, %161 : vector<4x256xf32>
    %163 = arith.addf %156, %162 : vector<4x256xf32>
    %c0_101 = arith.constant 0 : index
    %c22 = arith.constant 22 : index
    %164 = vector.load %arg6[%c0_101, %c22] : memref<4x358xf32, #tpu.memory_space<vmem>>, vector<4x256xf32>
    %c0_102 = arith.constant 0 : index
    %c13 = arith.constant 13 : index
    %165 = vector.load %arg3[%c0_102, %c13] : memref<4x49xf32, #tpu.memory_space<vmem>>, vector<4x1xf32>
    %166 = vector.broadcast %71 : vector<1x256xf32> to vector<4x256xf32>
    %167 = arith.mulf %164, %166 : vector<4x256xf32>
    %168 = vector.broadcast %165 : vector<4x1xf32> to vector<4x256xf32>
    %169 = arith.mulf %167, %168 : vector<4x256xf32>
    %170 = arith.addf %163, %169 : vector<4x256xf32>
    %c0_103 = arith.constant 0 : index
    %c32 = arith.constant 32 : index
    %171 = vector.load %arg6[%c0_103, %c32] : memref<4x358xf32, #tpu.memory_space<vmem>>, vector<4x256xf32>
    %c0_104 = arith.constant 0 : index
    %c14 = arith.constant 14 : index
    %172 = vector.load %arg3[%c0_104, %c14] : memref<4x49xf32, #tpu.memory_space<vmem>>, vector<4x1xf32>
    %173 = vector.broadcast %65 : vector<1x256xf32> to vector<4x256xf32>
    %174 = arith.mulf %171, %173 : vector<4x256xf32>
    %175 = vector.broadcast %172 : vector<4x1xf32> to vector<4x256xf32>
    %176 = arith.mulf %174, %175 : vector<4x256xf32>
    %177 = arith.addf %170, %176 : vector<4x256xf32>
    %c0_105 = arith.constant 0 : index
    %c33 = arith.constant 33 : index
    %178 = vector.load %arg6[%c0_105, %c33] : memref<4x358xf32, #tpu.memory_space<vmem>>, vector<4x256xf32>
    %c0_106 = arith.constant 0 : index
    %c15 = arith.constant 15 : index
    %179 = vector.load %arg3[%c0_106, %c15] : memref<4x49xf32, #tpu.memory_space<vmem>>, vector<4x1xf32>
    %180 = vector.broadcast %66 : vector<1x256xf32> to vector<4x256xf32>
    %181 = arith.mulf %178, %180 : vector<4x256xf32>
    %182 = vector.broadcast %179 : vector<4x1xf32> to vector<4x256xf32>
    %183 = arith.mulf %181, %182 : vector<4x256xf32>
    %184 = arith.addf %177, %183 : vector<4x256xf32>
    %c0_107 = arith.constant 0 : index
    %c34 = arith.constant 34 : index
    %185 = vector.load %arg6[%c0_107, %c34] : memref<4x358xf32, #tpu.memory_space<vmem>>, vector<4x256xf32>
    %c0_108 = arith.constant 0 : index
    %c16_109 = arith.constant 16 : index
    %186 = vector.load %arg3[%c0_108, %c16_109] : memref<4x49xf32, #tpu.memory_space<vmem>>, vector<4x1xf32>
    %187 = vector.broadcast %67 : vector<1x256xf32> to vector<4x256xf32>
    %188 = arith.mulf %185, %187 : vector<4x256xf32>
    %189 = vector.broadcast %186 : vector<4x1xf32> to vector<4x256xf32>
    %190 = arith.mulf %188, %189 : vector<4x256xf32>
    %191 = arith.addf %184, %190 : vector<4x256xf32>
    %c0_110 = arith.constant 0 : index
    %c35 = arith.constant 35 : index
    %192 = vector.load %arg6[%c0_110, %c35] : memref<4x358xf32, #tpu.memory_space<vmem>>, vector<4x256xf32>
    %c0_111 = arith.constant 0 : index
    %c17_112 = arith.constant 17 : index
    %193 = vector.load %arg3[%c0_111, %c17_112] : memref<4x49xf32, #tpu.memory_space<vmem>>, vector<4x1xf32>
    %194 = vector.broadcast %68 : vector<1x256xf32> to vector<4x256xf32>
    %195 = arith.mulf %192, %194 : vector<4x256xf32>
    %196 = vector.broadcast %193 : vector<4x1xf32> to vector<4x256xf32>
    %197 = arith.mulf %195, %196 : vector<4x256xf32>
    %198 = arith.addf %191, %197 : vector<4x256xf32>
    %c0_113 = arith.constant 0 : index
    %c36 = arith.constant 36 : index
    %199 = vector.load %arg6[%c0_113, %c36] : memref<4x358xf32, #tpu.memory_space<vmem>>, vector<4x256xf32>
    %c0_114 = arith.constant 0 : index
    %c18_115 = arith.constant 18 : index
    %200 = vector.load %arg3[%c0_114, %c18_115] : memref<4x49xf32, #tpu.memory_space<vmem>>, vector<4x1xf32>
    %201 = vector.broadcast %69 : vector<1x256xf32> to vector<4x256xf32>
    %202 = arith.mulf %199, %201 : vector<4x256xf32>
    %203 = vector.broadcast %200 : vector<4x1xf32> to vector<4x256xf32>
    %204 = arith.mulf %202, %203 : vector<4x256xf32>
    %205 = arith.addf %198, %204 : vector<4x256xf32>
    %c0_116 = arith.constant 0 : index
    %c37 = arith.constant 37 : index
    %206 = vector.load %arg6[%c0_116, %c37] : memref<4x358xf32, #tpu.memory_space<vmem>>, vector<4x256xf32>
    %c0_117 = arith.constant 0 : index
    %c19_118 = arith.constant 19 : index
    %207 = vector.load %arg3[%c0_117, %c19_118] : memref<4x49xf32, #tpu.memory_space<vmem>>, vector<4x1xf32>
    %208 = vector.broadcast %70 : vector<1x256xf32> to vector<4x256xf32>
    %209 = arith.mulf %206, %208 : vector<4x256xf32>
    %210 = vector.broadcast %207 : vector<4x1xf32> to vector<4x256xf32>
    %211 = arith.mulf %209, %210 : vector<4x256xf32>
    %212 = arith.addf %205, %211 : vector<4x256xf32>
    %c0_119 = arith.constant 0 : index
    %c38 = arith.constant 38 : index
    %213 = vector.load %arg6[%c0_119, %c38] : memref<4x358xf32, #tpu.memory_space<vmem>>, vector<4x256xf32>
    %c0_120 = arith.constant 0 : index
    %c20_121 = arith.constant 20 : index
    %214 = vector.load %arg3[%c0_120, %c20_121] : memref<4x49xf32, #tpu.memory_space<vmem>>, vector<4x1xf32>
    %215 = vector.broadcast %71 : vector<1x256xf32> to vector<4x256xf32>
    %216 = arith.mulf %213, %215 : vector<4x256xf32>
    %217 = vector.broadcast %214 : vector<4x1xf32> to vector<4x256xf32>
    %218 = arith.mulf %216, %217 : vector<4x256xf32>
    %219 = arith.addf %212, %218 : vector<4x256xf32>
    %c0_122 = arith.constant 0 : index
    %c48 = arith.constant 48 : index
    %220 = vector.load %arg6[%c0_122, %c48] : memref<4x358xf32, #tpu.memory_space<vmem>>, vector<4x256xf32>
    %c0_123 = arith.constant 0 : index
    %c21_124 = arith.constant 21 : index
    %221 = vector.load %arg3[%c0_123, %c21_124] : memref<4x49xf32, #tpu.memory_space<vmem>>, vector<4x1xf32>
    %222 = vector.broadcast %65 : vector<1x256xf32> to vector<4x256xf32>
    %223 = arith.mulf %220, %222 : vector<4x256xf32>
    %224 = vector.broadcast %221 : vector<4x1xf32> to vector<4x256xf32>
    %225 = arith.mulf %223, %224 : vector<4x256xf32>
    %226 = arith.addf %219, %225 : vector<4x256xf32>
    %c0_125 = arith.constant 0 : index
    %c49 = arith.constant 49 : index
    %227 = vector.load %arg6[%c0_125, %c49] : memref<4x358xf32, #tpu.memory_space<vmem>>, vector<4x256xf32>
    %c0_126 = arith.constant 0 : index
    %c22_127 = arith.constant 22 : index
    %228 = vector.load %arg3[%c0_126, %c22_127] : memref<4x49xf32, #tpu.memory_space<vmem>>, vector<4x1xf32>
    %229 = vector.broadcast %66 : vector<1x256xf32> to vector<4x256xf32>
    %230 = arith.mulf %227, %229 : vector<4x256xf32>
    %231 = vector.broadcast %228 : vector<4x1xf32> to vector<4x256xf32>
    %232 = arith.mulf %230, %231 : vector<4x256xf32>
    %233 = arith.addf %226, %232 : vector<4x256xf32>
    %c0_128 = arith.constant 0 : index
    %c50 = arith.constant 50 : index
    %234 = vector.load %arg6[%c0_128, %c50] : memref<4x358xf32, #tpu.memory_space<vmem>>, vector<4x256xf32>
    %c0_129 = arith.constant 0 : index
    %c23 = arith.constant 23 : index
    %235 = vector.load %arg3[%c0_129, %c23] : memref<4x49xf32, #tpu.memory_space<vmem>>, vector<4x1xf32>
    %236 = vector.broadcast %67 : vector<1x256xf32> to vector<4x256xf32>
    %237 = arith.mulf %234, %236 : vector<4x256xf32>
    %238 = vector.broadcast %235 : vector<4x1xf32> to vector<4x256xf32>
    %239 = arith.mulf %237, %238 : vector<4x256xf32>
    %240 = arith.addf %233, %239 : vector<4x256xf32>
    %c0_130 = arith.constant 0 : index
    %c51_131 = arith.constant 51 : index
    %241 = vector.load %arg6[%c0_130, %c51_131] : memref<4x358xf32, #tpu.memory_space<vmem>>, vector<4x256xf32>
    %c0_132 = arith.constant 0 : index
    %c24 = arith.constant 24 : index
    %242 = vector.load %arg3[%c0_132, %c24] : memref<4x49xf32, #tpu.memory_space<vmem>>, vector<4x1xf32>
    %243 = vector.broadcast %68 : vector<1x256xf32> to vector<4x256xf32>
    %244 = arith.mulf %241, %243 : vector<4x256xf32>
    %245 = vector.broadcast %242 : vector<4x1xf32> to vector<4x256xf32>
    %246 = arith.mulf %244, %245 : vector<4x256xf32>
    %247 = arith.addf %240, %246 : vector<4x256xf32>
    %c0_133 = arith.constant 0 : index
    %c52 = arith.constant 52 : index
    %248 = vector.load %arg6[%c0_133, %c52] : memref<4x358xf32, #tpu.memory_space<vmem>>, vector<4x256xf32>
    %c0_134 = arith.constant 0 : index
    %c25 = arith.constant 25 : index
    %249 = vector.load %arg3[%c0_134, %c25] : memref<4x49xf32, #tpu.memory_space<vmem>>, vector<4x1xf32>
    %250 = vector.broadcast %69 : vector<1x256xf32> to vector<4x256xf32>
    %251 = arith.mulf %248, %250 : vector<4x256xf32>
    %252 = vector.broadcast %249 : vector<4x1xf32> to vector<4x256xf32>
    %253 = arith.mulf %251, %252 : vector<4x256xf32>
    %254 = arith.addf %247, %253 : vector<4x256xf32>
    %c0_135 = arith.constant 0 : index
    %c53 = arith.constant 53 : index
    %255 = vector.load %arg6[%c0_135, %c53] : memref<4x358xf32, #tpu.memory_space<vmem>>, vector<4x256xf32>
    %c0_136 = arith.constant 0 : index
    %c26 = arith.constant 26 : index
    %256 = vector.load %arg3[%c0_136, %c26] : memref<4x49xf32, #tpu.memory_space<vmem>>, vector<4x1xf32>
    %257 = vector.broadcast %70 : vector<1x256xf32> to vector<4x256xf32>
    %258 = arith.mulf %255, %257 : vector<4x256xf32>
    %259 = vector.broadcast %256 : vector<4x1xf32> to vector<4x256xf32>
    %260 = arith.mulf %258, %259 : vector<4x256xf32>
    %261 = arith.addf %254, %260 : vector<4x256xf32>
    %c0_137 = arith.constant 0 : index
    %c54 = arith.constant 54 : index
    %262 = vector.load %arg6[%c0_137, %c54] : memref<4x358xf32, #tpu.memory_space<vmem>>, vector<4x256xf32>
    %c0_138 = arith.constant 0 : index
    %c27 = arith.constant 27 : index
    %263 = vector.load %arg3[%c0_138, %c27] : memref<4x49xf32, #tpu.memory_space<vmem>>, vector<4x1xf32>
    %264 = vector.broadcast %71 : vector<1x256xf32> to vector<4x256xf32>
    %265 = arith.mulf %262, %264 : vector<4x256xf32>
    %266 = vector.broadcast %263 : vector<4x1xf32> to vector<4x256xf32>
    %267 = arith.mulf %265, %266 : vector<4x256xf32>
    %268 = arith.addf %261, %267 : vector<4x256xf32>
    %c0_139 = arith.constant 0 : index
    %c64 = arith.constant 64 : index
    %269 = vector.load %arg6[%c0_139, %c64] : memref<4x358xf32, #tpu.memory_space<vmem>>, vector<4x256xf32>
    %c0_140 = arith.constant 0 : index
    %c28 = arith.constant 28 : index
    %270 = vector.load %arg3[%c0_140, %c28] : memref<4x49xf32, #tpu.memory_space<vmem>>, vector<4x1xf32>
    %271 = vector.broadcast %65 : vector<1x256xf32> to vector<4x256xf32>
    %272 = arith.mulf %269, %271 : vector<4x256xf32>
    %273 = vector.broadcast %270 : vector<4x1xf32> to vector<4x256xf32>
    %274 = arith.mulf %272, %273 : vector<4x256xf32>
    %275 = arith.addf %268, %274 : vector<4x256xf32>
    %c0_141 = arith.constant 0 : index
    %c65 = arith.constant 65 : index
    %276 = vector.load %arg6[%c0_141, %c65] : memref<4x358xf32, #tpu.memory_space<vmem>>, vector<4x256xf32>
    %c0_142 = arith.constant 0 : index
    %c29 = arith.constant 29 : index
    %277 = vector.load %arg3[%c0_142, %c29] : memref<4x49xf32, #tpu.memory_space<vmem>>, vector<4x1xf32>
    %278 = vector.broadcast %66 : vector<1x256xf32> to vector<4x256xf32>
    %279 = arith.mulf %276, %278 : vector<4x256xf32>
    %280 = vector.broadcast %277 : vector<4x1xf32> to vector<4x256xf32>
    %281 = arith.mulf %279, %280 : vector<4x256xf32>
    %282 = arith.addf %275, %281 : vector<4x256xf32>
    %c0_143 = arith.constant 0 : index
    %c66 = arith.constant 66 : index
    %283 = vector.load %arg6[%c0_143, %c66] : memref<4x358xf32, #tpu.memory_space<vmem>>, vector<4x256xf32>
    %c0_144 = arith.constant 0 : index
    %c30 = arith.constant 30 : index
    %284 = vector.load %arg3[%c0_144, %c30] : memref<4x49xf32, #tpu.memory_space<vmem>>, vector<4x1xf32>
    %285 = vector.broadcast %67 : vector<1x256xf32> to vector<4x256xf32>
    %286 = arith.mulf %283, %285 : vector<4x256xf32>
    %287 = vector.broadcast %284 : vector<4x1xf32> to vector<4x256xf32>
    %288 = arith.mulf %286, %287 : vector<4x256xf32>
    %289 = arith.addf %282, %288 : vector<4x256xf32>
    %c0_145 = arith.constant 0 : index
    %c67 = arith.constant 67 : index
    %290 = vector.load %arg6[%c0_145, %c67] : memref<4x358xf32, #tpu.memory_space<vmem>>, vector<4x256xf32>
    %c0_146 = arith.constant 0 : index
    %c31 = arith.constant 31 : index
    %291 = vector.load %arg3[%c0_146, %c31] : memref<4x49xf32, #tpu.memory_space<vmem>>, vector<4x1xf32>
    %292 = vector.broadcast %68 : vector<1x256xf32> to vector<4x256xf32>
    %293 = arith.mulf %290, %292 : vector<4x256xf32>
    %294 = vector.broadcast %291 : vector<4x1xf32> to vector<4x256xf32>
    %295 = arith.mulf %293, %294 : vector<4x256xf32>
    %296 = arith.addf %289, %295 : vector<4x256xf32>
    %c0_147 = arith.constant 0 : index
    %c68 = arith.constant 68 : index
    %297 = vector.load %arg6[%c0_147, %c68] : memref<4x358xf32, #tpu.memory_space<vmem>>, vector<4x256xf32>
    %c0_148 = arith.constant 0 : index
    %c32_149 = arith.constant 32 : index
    %298 = vector.load %arg3[%c0_148, %c32_149] : memref<4x49xf32, #tpu.memory_space<vmem>>, vector<4x1xf32>
    %299 = vector.broadcast %69 : vector<1x256xf32> to vector<4x256xf32>
    %300 = arith.mulf %297, %299 : vector<4x256xf32>
    %301 = vector.broadcast %298 : vector<4x1xf32> to vector<4x256xf32>
    %302 = arith.mulf %300, %301 : vector<4x256xf32>
    %303 = arith.addf %296, %302 : vector<4x256xf32>
    %c0_150 = arith.constant 0 : index
    %c69 = arith.constant 69 : index
    %304 = vector.load %arg6[%c0_150, %c69] : memref<4x358xf32, #tpu.memory_space<vmem>>, vector<4x256xf32>
    %c0_151 = arith.constant 0 : index
    %c33_152 = arith.constant 33 : index
    %305 = vector.load %arg3[%c0_151, %c33_152] : memref<4x49xf32, #tpu.memory_space<vmem>>, vector<4x1xf32>
    %306 = vector.broadcast %70 : vector<1x256xf32> to vector<4x256xf32>
    %307 = arith.mulf %304, %306 : vector<4x256xf32>
    %308 = vector.broadcast %305 : vector<4x1xf32> to vector<4x256xf32>
    %309 = arith.mulf %307, %308 : vector<4x256xf32>
    %310 = arith.addf %303, %309 : vector<4x256xf32>
    %c0_153 = arith.constant 0 : index
    %c70 = arith.constant 70 : index
    %311 = vector.load %arg6[%c0_153, %c70] : memref<4x358xf32, #tpu.memory_space<vmem>>, vector<4x256xf32>
    %c0_154 = arith.constant 0 : index
    %c34_155 = arith.constant 34 : index
    %312 = vector.load %arg3[%c0_154, %c34_155] : memref<4x49xf32, #tpu.memory_space<vmem>>, vector<4x1xf32>
    %313 = vector.broadcast %71 : vector<1x256xf32> to vector<4x256xf32>
    %314 = arith.mulf %311, %313 : vector<4x256xf32>
    %315 = vector.broadcast %312 : vector<4x1xf32> to vector<4x256xf32>
    %316 = arith.mulf %314, %315 : vector<4x256xf32>
    %317 = arith.addf %310, %316 : vector<4x256xf32>
    %c0_156 = arith.constant 0 : index
    %c80 = arith.constant 80 : index
    %318 = vector.load %arg6[%c0_156, %c80] : memref<4x358xf32, #tpu.memory_space<vmem>>, vector<4x256xf32>
    %c0_157 = arith.constant 0 : index
    %c35_158 = arith.constant 35 : index
    %319 = vector.load %arg3[%c0_157, %c35_158] : memref<4x49xf32, #tpu.memory_space<vmem>>, vector<4x1xf32>
    %320 = vector.broadcast %65 : vector<1x256xf32> to vector<4x256xf32>
    %321 = arith.mulf %318, %320 : vector<4x256xf32>
    %322 = vector.broadcast %319 : vector<4x1xf32> to vector<4x256xf32>
    %323 = arith.mulf %321, %322 : vector<4x256xf32>
    %324 = arith.addf %317, %323 : vector<4x256xf32>
    %c0_159 = arith.constant 0 : index
    %c81 = arith.constant 81 : index
    %325 = vector.load %arg6[%c0_159, %c81] : memref<4x358xf32, #tpu.memory_space<vmem>>, vector<4x256xf32>
    %c0_160 = arith.constant 0 : index
    %c36_161 = arith.constant 36 : index
    %326 = vector.load %arg3[%c0_160, %c36_161] : memref<4x49xf32, #tpu.memory_space<vmem>>, vector<4x1xf32>
    %327 = vector.broadcast %66 : vector<1x256xf32> to vector<4x256xf32>
    %328 = arith.mulf %325, %327 : vector<4x256xf32>
    %329 = vector.broadcast %326 : vector<4x1xf32> to vector<4x256xf32>
    %330 = arith.mulf %328, %329 : vector<4x256xf32>
    %331 = arith.addf %324, %330 : vector<4x256xf32>
    %c0_162 = arith.constant 0 : index
    %c82 = arith.constant 82 : index
    %332 = vector.load %arg6[%c0_162, %c82] : memref<4x358xf32, #tpu.memory_space<vmem>>, vector<4x256xf32>
    %c0_163 = arith.constant 0 : index
    %c37_164 = arith.constant 37 : index
    %333 = vector.load %arg3[%c0_163, %c37_164] : memref<4x49xf32, #tpu.memory_space<vmem>>, vector<4x1xf32>
    %334 = vector.broadcast %67 : vector<1x256xf32> to vector<4x256xf32>
    %335 = arith.mulf %332, %334 : vector<4x256xf32>
    %336 = vector.broadcast %333 : vector<4x1xf32> to vector<4x256xf32>
    %337 = arith.mulf %335, %336 : vector<4x256xf32>
    %338 = arith.addf %331, %337 : vector<4x256xf32>
    %c0_165 = arith.constant 0 : index
    %c83 = arith.constant 83 : index
    %339 = vector.load %arg6[%c0_165, %c83] : memref<4x358xf32, #tpu.memory_space<vmem>>, vector<4x256xf32>
    %c0_166 = arith.constant 0 : index
    %c38_167 = arith.constant 38 : index
    %340 = vector.load %arg3[%c0_166, %c38_167] : memref<4x49xf32, #tpu.memory_space<vmem>>, vector<4x1xf32>
    %341 = vector.broadcast %68 : vector<1x256xf32> to vector<4x256xf32>
    %342 = arith.mulf %339, %341 : vector<4x256xf32>
    %343 = vector.broadcast %340 : vector<4x1xf32> to vector<4x256xf32>
    %344 = arith.mulf %342, %343 : vector<4x256xf32>
    %345 = arith.addf %338, %344 : vector<4x256xf32>
    %c0_168 = arith.constant 0 : index
    %c84 = arith.constant 84 : index
    %346 = vector.load %arg6[%c0_168, %c84] : memref<4x358xf32, #tpu.memory_space<vmem>>, vector<4x256xf32>
    %c0_169 = arith.constant 0 : index
    %c39 = arith.constant 39 : index
    %347 = vector.load %arg3[%c0_169, %c39] : memref<4x49xf32, #tpu.memory_space<vmem>>, vector<4x1xf32>
    %348 = vector.broadcast %69 : vector<1x256xf32> to vector<4x256xf32>
    %349 = arith.mulf %346, %348 : vector<4x256xf32>
    %350 = vector.broadcast %347 : vector<4x1xf32> to vector<4x256xf32>
    %351 = arith.mulf %349, %350 : vector<4x256xf32>
    %352 = arith.addf %345, %351 : vector<4x256xf32>
    %c0_170 = arith.constant 0 : index
    %c85 = arith.constant 85 : index
    %353 = vector.load %arg6[%c0_170, %c85] : memref<4x358xf32, #tpu.memory_space<vmem>>, vector<4x256xf32>
    %c0_171 = arith.constant 0 : index
    %c40 = arith.constant 40 : index
    %354 = vector.load %arg3[%c0_171, %c40] : memref<4x49xf32, #tpu.memory_space<vmem>>, vector<4x1xf32>
    %355 = vector.broadcast %70 : vector<1x256xf32> to vector<4x256xf32>
    %356 = arith.mulf %353, %355 : vector<4x256xf32>
    %357 = vector.broadcast %354 : vector<4x1xf32> to vector<4x256xf32>
    %358 = arith.mulf %356, %357 : vector<4x256xf32>
    %359 = arith.addf %352, %358 : vector<4x256xf32>
    %c0_172 = arith.constant 0 : index
    %c86 = arith.constant 86 : index
    %360 = vector.load %arg6[%c0_172, %c86] : memref<4x358xf32, #tpu.memory_space<vmem>>, vector<4x256xf32>
    %c0_173 = arith.constant 0 : index
    %c41 = arith.constant 41 : index
    %361 = vector.load %arg3[%c0_173, %c41] : memref<4x49xf32, #tpu.memory_space<vmem>>, vector<4x1xf32>
    %362 = vector.broadcast %71 : vector<1x256xf32> to vector<4x256xf32>
    %363 = arith.mulf %360, %362 : vector<4x256xf32>
    %364 = vector.broadcast %361 : vector<4x1xf32> to vector<4x256xf32>
    %365 = arith.mulf %363, %364 : vector<4x256xf32>
    %366 = arith.addf %359, %365 : vector<4x256xf32>
    %c0_174 = arith.constant 0 : index
    %c96 = arith.constant 96 : index
    %367 = vector.load %arg6[%c0_174, %c96] : memref<4x358xf32, #tpu.memory_space<vmem>>, vector<4x256xf32>
    %c0_175 = arith.constant 0 : index
    %c42 = arith.constant 42 : index
    %368 = vector.load %arg3[%c0_175, %c42] : memref<4x49xf32, #tpu.memory_space<vmem>>, vector<4x1xf32>
    %369 = vector.broadcast %65 : vector<1x256xf32> to vector<4x256xf32>
    %370 = arith.mulf %367, %369 : vector<4x256xf32>
    %371 = vector.broadcast %368 : vector<4x1xf32> to vector<4x256xf32>
    %372 = arith.mulf %370, %371 : vector<4x256xf32>
    %373 = arith.addf %366, %372 : vector<4x256xf32>
    %c0_176 = arith.constant 0 : index
    %c97 = arith.constant 97 : index
    %374 = vector.load %arg6[%c0_176, %c97] : memref<4x358xf32, #tpu.memory_space<vmem>>, vector<4x256xf32>
    %c0_177 = arith.constant 0 : index
    %c43 = arith.constant 43 : index
    %375 = vector.load %arg3[%c0_177, %c43] : memref<4x49xf32, #tpu.memory_space<vmem>>, vector<4x1xf32>
    %376 = vector.broadcast %66 : vector<1x256xf32> to vector<4x256xf32>
    %377 = arith.mulf %374, %376 : vector<4x256xf32>
    %378 = vector.broadcast %375 : vector<4x1xf32> to vector<4x256xf32>
    %379 = arith.mulf %377, %378 : vector<4x256xf32>
    %380 = arith.addf %373, %379 : vector<4x256xf32>
    %c0_178 = arith.constant 0 : index
    %c98 = arith.constant 98 : index
    %381 = vector.load %arg6[%c0_178, %c98] : memref<4x358xf32, #tpu.memory_space<vmem>>, vector<4x256xf32>
    %c0_179 = arith.constant 0 : index
    %c44 = arith.constant 44 : index
    %382 = vector.load %arg3[%c0_179, %c44] : memref<4x49xf32, #tpu.memory_space<vmem>>, vector<4x1xf32>
    %383 = vector.broadcast %67 : vector<1x256xf32> to vector<4x256xf32>
    %384 = arith.mulf %381, %383 : vector<4x256xf32>
    %385 = vector.broadcast %382 : vector<4x1xf32> to vector<4x256xf32>
    %386 = arith.mulf %384, %385 : vector<4x256xf32>
    %387 = arith.addf %380, %386 : vector<4x256xf32>
    %c0_180 = arith.constant 0 : index
    %c99 = arith.constant 99 : index
    %388 = vector.load %arg6[%c0_180, %c99] : memref<4x358xf32, #tpu.memory_space<vmem>>, vector<4x256xf32>
    %c0_181 = arith.constant 0 : index
    %c45 = arith.constant 45 : index
    %389 = vector.load %arg3[%c0_181, %c45] : memref<4x49xf32, #tpu.memory_space<vmem>>, vector<4x1xf32>
    %390 = vector.broadcast %68 : vector<1x256xf32> to vector<4x256xf32>
    %391 = arith.mulf %388, %390 : vector<4x256xf32>
    %392 = vector.broadcast %389 : vector<4x1xf32> to vector<4x256xf32>
    %393 = arith.mulf %391, %392 : vector<4x256xf32>
    %394 = arith.addf %387, %393 : vector<4x256xf32>
    %c0_182 = arith.constant 0 : index
    %c100 = arith.constant 100 : index
    %395 = vector.load %arg6[%c0_182, %c100] : memref<4x358xf32, #tpu.memory_space<vmem>>, vector<4x256xf32>
    %c0_183 = arith.constant 0 : index
    %c46 = arith.constant 46 : index
    %396 = vector.load %arg3[%c0_183, %c46] : memref<4x49xf32, #tpu.memory_space<vmem>>, vector<4x1xf32>
    %397 = vector.broadcast %69 : vector<1x256xf32> to vector<4x256xf32>
    %398 = arith.mulf %395, %397 : vector<4x256xf32>
    %399 = vector.broadcast %396 : vector<4x1xf32> to vector<4x256xf32>
    %400 = arith.mulf %398, %399 : vector<4x256xf32>
    %401 = arith.addf %394, %400 : vector<4x256xf32>
    %c0_184 = arith.constant 0 : index
    %c101 = arith.constant 101 : index
    %402 = vector.load %arg6[%c0_184, %c101] : memref<4x358xf32, #tpu.memory_space<vmem>>, vector<4x256xf32>
    %c0_185 = arith.constant 0 : index
    %c47 = arith.constant 47 : index
    %403 = vector.load %arg3[%c0_185, %c47] : memref<4x49xf32, #tpu.memory_space<vmem>>, vector<4x1xf32>
    %404 = vector.broadcast %70 : vector<1x256xf32> to vector<4x256xf32>
    %405 = arith.mulf %402, %404 : vector<4x256xf32>
    %406 = vector.broadcast %403 : vector<4x1xf32> to vector<4x256xf32>
    %407 = arith.mulf %405, %406 : vector<4x256xf32>
    %408 = arith.addf %401, %407 : vector<4x256xf32>
    %c0_186 = arith.constant 0 : index
    %c102 = arith.constant 102 : index
    %409 = vector.load %arg6[%c0_186, %c102] : memref<4x358xf32, #tpu.memory_space<vmem>>, vector<4x256xf32>
    %c0_187 = arith.constant 0 : index
    %c48_188 = arith.constant 48 : index
    %410 = vector.load %arg3[%c0_187, %c48_188] : memref<4x49xf32, #tpu.memory_space<vmem>>, vector<4x1xf32>
    %411 = vector.broadcast %71 : vector<1x256xf32> to vector<4x256xf32>
    %412 = arith.mulf %409, %411 : vector<4x256xf32>
    %413 = vector.broadcast %410 : vector<4x1xf32> to vector<4x256xf32>
    %414 = arith.mulf %412, %413 : vector<4x256xf32>
    %415 = arith.addf %408, %414 : vector<4x256xf32>
    %416 = vector.extract_strided_slice %415 {offsets = [0, 0], sizes = [2, 256], strides = [1, 1]} : vector<4x256xf32> to vector<2x256xf32>
    %417 = vector.extract_strided_slice %415 {offsets = [2, 0], sizes = [2, 256], strides = [1, 1]} : vector<4x256xf32> to vector<2x256xf32>
    %418 = arith.addf %416, %417 : vector<2x256xf32>
    %cst_189 = arith.constant 5.000000e-01 : f32
    %419 = vector.broadcast %cst_189 : f32 to vector<2x256xf32>
    %420 = arith.mulf %419, %418 : vector<2x256xf32>
    %421 = math.tanh %420 : vector<2x256xf32>
    %cst_190 = arith.constant 5.000000e-01 : f32
    %422 = vector.broadcast %cst_190 : f32 to vector<2x256xf32>
    %423 = arith.mulf %422, %421 : vector<2x256xf32>
    %cst_191 = arith.constant 5.000000e-01 : f32
    %424 = vector.broadcast %cst_191 : f32 to vector<2x256xf32>
    %425 = arith.addf %423, %424 : vector<2x256xf32>
    %426 = vector.extract_strided_slice %425 {offsets = [0, 0], sizes = [1, 256], strides = [1, 1]} : vector<2x256xf32> to vector<1x256xf32>
    %427 = vector.broadcast %426 : vector<1x256xf32> to vector<32x256xf32>
    %428 = arith.mulf %43, %427 : vector<32x256xf32>
    %c0_192 = arith.constant 0 : index
    %c0_193 = arith.constant 0 : index
    %c0_194 = arith.constant 0 : index
    %429 = vector.load %arg5[%c0_192, %c0_193, %c0_194] : memref<2x32x256xf32, #tpu.memory_space<vmem>>, vector<1x32x256xf32>
    %430 = vector.shape_cast %429 : vector<1x32x256xf32> to vector<32x256xf32>
    %431 = vector.shape_cast %428 : vector<32x256xf32> to vector<1x32x256xf32>
    tpu.vector_store %arg5[%c0_192, %c0_193, %c0_194], %431 {strides = array<i32>} : memref<2x32x256xf32, #tpu.memory_space<vmem>>, vector<1x32x256xf32>,
    %432 = vector.extract_strided_slice %425 {offsets = [1, 0], sizes = [1, 256], strides = [1, 1]} : vector<2x256xf32> to vector<1x256xf32>
    %433 = vector.broadcast %432 : vector<1x256xf32> to vector<32x256xf32>
    %434 = arith.mulf %56, %433 : vector<32x256xf32>
    %c1_195 = arith.constant 1 : index
    %c0_196 = arith.constant 0 : index
    %c0_197 = arith.constant 0 : index
    %435 = vector.load %arg5[%c1_195, %c0_196, %c0_197] : memref<2x32x256xf32, #tpu.memory_space<vmem>>, vector<1x32x256xf32>
    %436 = vector.shape_cast %435 : vector<1x32x256xf32> to vector<32x256xf32>
    %437 = vector.shape_cast %434 : vector<32x256xf32> to vector<1x32x256xf32>
    tpu.vector_store %arg5[%c1_195, %c0_196, %c0_197], %437 {strides = array<i32>} : memref<2x32x256xf32, #tpu.memory_space<vmem>>, vector<1x32x256xf32>,
    return
  }
}

</mosaic_0001>

<llo_original>
// kernel: tpu_custom_call.1
$region0: #{tpu_custom_call.1}
  #allocation0 [shape = 'u32[]', space=smem, size = 0x4, offset = 0x4, fixed_abs, tag = 'smem constant byte address 0x4 - core index']
  #allocation1 [shape = 'u32[144,128]{1,0:T(1,128)}', space=vmem, size = 0x12000, scoped, tag = 'internal scratch']
  #allocation2 [shape = 'f32[4,358]{1,0:T(4,128)}', space=vmem, size = 0x1800, scoped, tag = 'scratch operand']
  #allocation3 [shape = 'f32[32,4]{1,0:T(8,128)}', space=vmem, size = 0x4000, scoped, tag = 'scratch operand']
  %s0 = inlined_call_operand.hbm [shape: f32[2,32,256], index: 0, kind: input, shape index: {}]
  %s1 = inlined_call_operand.vmem [shape: f32[8,32], index: 1, kind: input, shape index: {}]
  %s2 = inlined_call_operand.vmem [shape: f32[32,8], index: 2, kind: input, shape index: {}]
  %s3 = inlined_call_operand.vmem [shape: f32[4,49], index: 3, kind: input, shape index: {}]
  %s4 = inlined_call_operand.vmem [shape: f32[7,256], index: 4, kind: input, shape index: {}]
  %s5 = inlined_call_operand.hbm [shape: f32[2,32,256], index: 5, kind: output, shape index: {}]
  %s6 = sld [smem:[#allocation0]]
  $region34: #{tpu_custom_call.1} parent=0
    _
  %s8 = ssub.s32 1, %s6
  %s9 = scalar_select 0, %s8, %s6
  $region1: #{tpu_custom_call.1} parent=0
    #allocation4 [shape = 'u8[65536]{0}', space=vmem, size = 0x10000, scoped, tag = 'input window, operand 0, single buffered']
    #allocation5 [shape = 's32[1]{0}', space=sflag, size = 0x4, scoped, tag = 'scoped memory for tpu_custom_call.1']
    #allocation6 [shape = 's32[1]{0}', space=sflag, size = 0x4, scoped, tag = 'scoped memory for tpu_custom_call.1']
    #allocation7 [shape = 'u8[65536]{0}', space=vmem, size = 0x10000, scoped, tag = 'output window, operand 0, single buffered']
    %10 = vsyncpa [#allocation5], 0
    %11 = vsyncpa [#allocation6], 0
    // Predicated region
    $region2: #{tpu_custom_call.1} parent=1 // pred_check
      _
    $region3: #{tpu_custom_call.1} parent=1 // pred_check_branch
      %13 = sbr.rel (0) target = $region5
    $region4: #{tpu_custom_call.1} parent=1 // pred_region
      %s15 = ssub.s32 2048, 2048
      %16 = vsyncadd [#allocation5], %s15
      %s17 = sshll.u32 [#allocation4], 4
      %s18 = int_to_ptr.vmem [resolvable:$true] %s17
      %23 = dma.hbm_to_vmem [thread:$0]  %s0, 2048, %s18, [#allocation5], 256, 256, 16
    $region5: #{tpu_custom_call.1} parent=1 // pred_fallthru
      _
    // Predicated region
    $region6: #{tpu_custom_call.1} parent=1 // pred_check
      _
    $region7: #{tpu_custom_call.1} parent=1 // pred_check_branch
      %25 = sbr.rel (0) target = $region9
    $region8: #{tpu_custom_call.1} parent=1 // pred_region
      _
    $region9: #{tpu_custom_call.1} parent=1 // pred_fallthru
      _
    // Predicated region
    $region10: #{tpu_custom_call.1} parent=1 // pred_check
      _
    $region11: #{tpu_custom_call.1} parent=1 // pred_check_branch
      %27 = sbr.rel (0) target = $region13
    $region12: #{tpu_custom_call.1} parent=1 // pred_region
      _
    $region13: #{tpu_custom_call.1} parent=1 // pred_fallthru
      _
    // Predicated region
    $region14: #{tpu_custom_call.1} parent=1 // pred_check
      _
    $region15: #{tpu_custom_call.1} parent=1 // pred_check_branch
      %29 = sbr.rel (0) target = $region17
    $region16: #{tpu_custom_call.1} parent=1 // pred_region
      _
    $region17: #{tpu_custom_call.1} parent=1 // pred_fallthru
      _
    // Predicated region
    $region18: #{tpu_custom_call.1} parent=1 // pred_check
      _
    $region19: #{tpu_custom_call.1} parent=1 // pred_check_branch
      %31 = sbr.rel (0) target = $region21
    $region20: #{tpu_custom_call.1} parent=1 // pred_region
      _
    $region21: #{tpu_custom_call.1} parent=1 // pred_fallthru
      _
    // Predicated region
    $region22: #{tpu_custom_call.1} parent=1 // pred_check
      _
    $region23: #{tpu_custom_call.1} parent=1 // pred_check_branch
      %33 = sbr.rel (0) target = $region25
    $region24: #{tpu_custom_call.1} parent=1 // pred_region
      %34 = dma.done [#allocation5], 2048
    $region25: #{tpu_custom_call.1} parent=1 // pred_fallthru
      _
    %v35 = vld [vmem:[#allocation4] sm:$0xff]
    %v36 = vld [vmem:[#allocation4 + $0x8] sm:$0xff]
    %v37 = vld [vmem:[#allocation4 + $0x10] sm:$0xff]
    %v38 = vld [vmem:[#allocation4 + $0x18] sm:$0xff]
    %v39 = vld [vmem:[#allocation4 + $0x20] sm:$0xff]
    %v40 = vld [vmem:[#allocation4 + $0x28] sm:$0xff]
    %v41 = vld [vmem:[#allocation4 + $0x30] sm:$0xff]
    %v42 = vld [vmem:[#allocation4 + $0x38] sm:$0xff]
    %v43 = vadd.f32 %v35, %v36
    %44 = vadd.xlane.f32.xlu0 %v43
    %v45 = vpop.xlane.xlu0 %44
    %v46 = vadd.f32 %v37, %v38
    %47 = vadd.xlane.f32.xlu0 %v46
    %v48 = vpop.xlane.xlu0 %47
    %v49 = vadd.f32 %v39, %v40
    %50 = vadd.xlane.f32.xlu0 %v49
    %v51 = vpop.xlane.xlu0 %50
    %v52 = vadd.f32 %v41, %v42
    %53 = vadd.xlane.f32.xlu0 %v52
    %v54 = vpop.xlane.xlu0 %53
    %v55 = vmul.f32 %v45, 0.00390625
    %v56 = vmul.f32 %v48, 0.00390625
    %v57 = vmul.f32 %v51, 0.00390625
    %v58 = vmul.f32 %v54, 0.00390625
    %vm59 = vcmask 7168
    %60 = vst.msk [vmem:[#allocation3] sm:$0xff] %vm59, %v55
    %61 = vst.msk [vmem:[#allocation3 + $0x8] sm:$0xff] %vm59, %v56
    %62 = vst.msk [vmem:[#allocation3 + $0x10] sm:$0xff] %vm59, %v57
    %63 = vst.msk [vmem:[#allocation3 + $0x18] sm:$0xff] %vm59, %v58
    %v64 = vmax.f32 %v35, %v36
    %65 = vmax.xlane.f32.xlu0 %v64
    %v66 = vpop.xlane.xlu0 %65
    %v67 = vmax.f32 %v37, %v38
    %68 = vmax.xlane.f32.xlu0 %v67
    %v69 = vpop.xlane.xlu0 %68
    %v70 = vmax.f32 %v39, %v40
    %71 = vmax.xlane.f32.xlu0 %v70
    %v72 = vpop.xlane.xlu0 %71
    %v73 = vmax.f32 %v41, %v42
    %74 = vmax.xlane.f32.xlu0 %v73
    %v75 = vpop.xlane.xlu0 %74
    %vm76 = vcmask 23568
    %77 = vst.msk [vmem:[#allocation3] sm:$0xff] %vm76, %v66
    %78 = vst.msk [vmem:[#allocation3 + $0x8] sm:$0xff] %vm76, %v69
    %79 = vst.msk [vmem:[#allocation3 + $0x10] sm:$0xff] %vm76, %v72
    %80 = vst.msk [vmem:[#allocation3 + $0x18] sm:$0xff] %vm76, %v75
    %s81 = scalar_lea.vmem [#allocation4], 64
    %v82 = vld [vmem:[%s81] sm:$0xff]
    %v83 = vld [vmem:[%s81 + $0x8] sm:$0xff]
    %v84 = vld [vmem:[%s81 + $0x10] sm:$0xff]
    %v85 = vld [vmem:[%s81 + $0x18] sm:$0xff]
    %v86 = vld [vmem:[%s81 + $0x20] sm:$0xff]
    %v87 = vld [vmem:[%s81 + $0x28] sm:$0xff]
    %v88 = vld [vmem:[%s81 + $0x30] sm:$0xff]
    %v89 = vld [vmem:[%s81 + $0x38] sm:$0xff]
    %v90 = vadd.f32 %v82, %v83
    %91 = vadd.xlane.f32.xlu0 %v90
    %v92 = vpop.xlane.xlu0 %91
    %v93 = vadd.f32 %v84, %v85
    %94 = vadd.xlane.f32.xlu0 %v93
    %v95 = vpop.xlane.xlu0 %94
    %v96 = vadd.f32 %v86, %v87
    %97 = vadd.xlane.f32.xlu0 %v96
    %v98 = vpop.xlane.xlu0 %97
    %v99 = vadd.f32 %v88, %v89
    %100 = vadd.xlane.f32.xlu0 %v99
    %v101 = vpop.xlane.xlu0 %100
    %v102 = vmul.f32 %v92, 0.00390625
    %v103 = vmul.f32 %v95, 0.00390625
    %v104 = vmul.f32 %v98, 0.00390625
    %v105 = vmul.f32 %v101, 0.00390625
    %vm106 = vcmask 15368
    %107 = vst.msk [vmem:[#allocation3] sm:$0xff] %vm106, %v102
    %108 = vst.msk [vmem:[#allocation3 + $0x8] sm:$0xff] %vm106, %v103
    %109 = vst.msk [vmem:[#allocation3 + $0x10] sm:$0xff] %vm106, %v104
    %110 = vst.msk [vmem:[#allocation3 + $0x18] sm:$0xff] %vm106, %v105
    %v111 = vmax.f32 %v82, %v83
    %112 = vmax.xlane.f32.xlu0 %v111
    %v113 = vpop.xlane.xlu0 %112
    %v114 = vmax.f32 %v84, %v85
    %115 = vmax.xlane.f32.xlu0 %v114
    %v116 = vpop.xlane.xlu0 %115
    %v117 = vmax.f32 %v86, %v87
    %118 = vmax.xlane.f32.xlu0 %v117
    %v119 = vpop.xlane.xlu0 %118
    %v120 = vmax.f32 %v88, %v89
    %121 = vmax.xlane.f32.xlu0 %v120
    %v122 = vpop.xlane.xlu0 %121
    %vm123 = vcmask 31768
    %124 = vst.msk [vmem:[#allocation3] sm:$0xff] %vm123, %v113
    %125 = vst.msk [vmem:[#allocation3 + $0x8] sm:$0xff] %vm123, %v116
    %126 = vst.msk [vmem:[#allocation3 + $0x10] sm:$0xff] %vm123, %v119
    %127 = vst.msk [vmem:[#allocation3 + $0x18] sm:$0xff] %vm123, %v122
    %v128 = vld [vmem:[%s1] sm:$0xff]
    %v129 = vld [vmem:[#allocation3] sm:$0xff]
    %v130 = vld [vmem:[#allocation3 + $0x8] sm:$0xff]
    %v131 = vld [vmem:[#allocation3 + $0x10] sm:$0xff]
    %v132 = vld [vmem:[#allocation3 + $0x18] sm:$0xff]
    %vm133 = vcmask 261120
    %v135 = vsel %vm133, %v128, 0
    %137 = vmatprep.subr.mxu0 0.0
    %138 = vmatpush1.msra.mxu0 %v129
    %139 = vmatprep.subr.mxu0 0.0
    %140 = vmatpush1.msra.mxu0 %v130
    %141 = vmatprep.subr.mxu0 0.0
    %142 = vmatpush1.msra.mxu0 %v131
    %143 = vmatprep.subr.mxu0 0.0
    %144 = vmatpush1.msra.mxu0 %v132
    %145 = vmatprep.subr.mxu0 0.0
    %146 = vmatpush1.msra.mxu0 0.0
    %147 = vmatprep.subr.mxu0 0.0
    %148 = vmatpush1.msra.mxu0 0.0
    %149 = vmatprep.subr.mxu0 0.0
    %150 = vmatpush1.msra.mxu0 0.0
    %151 = vmatprep.subr.mxu0 0.0
    %152 = vmatpush1.msra.mxu0 0.0
    %153 = vmatprep.subr.mxu0 0.0
    %154 = vmatpush1.msra.mxu0 0.0
    %155 = vmatprep.subr.mxu0 0.0
    %156 = vmatpush1.msra.mxu0 0.0
    %157 = vmatprep.subr.mxu0 0.0
    %158 = vmatpush1.msra.mxu0 0.0
    %159 = vmatprep.subr.mxu0 0.0
    %160 = vmatpush1.msra.mxu0 0.0
    %161 = vmatprep.subr.mxu0 0.0
    %162 = vmatpush1.msra.mxu0 0.0
    %163 = vmatprep.subr.mxu0 0.0
    %164 = vmatpush1.msra.mxu0 0.0
    %165 = vmatprep.subr.mxu0 0.0
    %166 = vmatpush1.msra.mxu0 0.0
    %167 = vmatprep.subr.mxu0 0.0
    %168 = vmatpush1.msra.mxu0 0.0
    %169 = vmatprep.subr.mxu0 0.0
    %170 = vmatpush1.msra.mxu0 0.0
    %171 = vmatprep.subr.mxu0 0.0
    %172 = vmatpush1.msra.mxu0 0.0
    %173 = vmatprep.subr.mxu0 0.0
    %174 = vmatpush1.msra.mxu0 0.0
    %175 = vmatprep.subr.mxu0 0.0
    %176 = vmatpush1.msra.mxu0 0.0
    %177 = vmatprep.subr.mxu0 0.0
    %178 = vmatpush1.msra.mxu0 0.0
    %179 = vmatprep.subr.mxu0 0.0
    %180 = vmatpush1.msra.mxu0 0.0
    %181 = vmatprep.subr.mxu0 0.0
    %182 = vmatpush1.msra.mxu0 0.0
    %183 = vmatprep.subr.mxu0 0.0
    %184 = vmatpush1.msra.mxu0 0.0
    %185 = vmatprep.subr.mxu0 0.0
    %186 = vmatpush1.msra.mxu0 0.0
    %187 = vmatprep.subr.mxu0 0.0
    %188 = vmatpush1.msra.mxu0 0.0
    %189 = vmatprep.subr.mxu0 0.0
    %190 = vmatpush1.msra.mxu0 0.0
    %191 = vmatprep.subr.mxu0 0.0
    %192 = vmatpush1.msra.mxu0 0.0
    %193 = vmatprep.subr.mxu0 0.0
    %194 = vmatpush1.msra.mxu0 0.0
    %195 = vmatprep.subr.mxu0 0.0
    %196 = vmatpush1.msra.mxu0 0.0
    %197 = vmatprep.subr.mxu0 0.0
    %198 = vmatpush1.msra.mxu0 0.0
    %199 = vmatprep.subr.mxu0 0.0
    %200 = vmatpush1.msra.mxu0 0.0
    %201 = vmatprep.mubr.f32.mxu0 0.0
    %202 = vmatmul.mubr.f32.gmra.mrb[0].mxu0 %v135
    %v203 = vpop.f32.mrb[0].mxu0
    %v204 = vadd.f32 0.0, %v203
    %v205 = vpop.f32.mrb[0].mxu0
    %206 = vdwg.mxu0
    %v207 = vmax.f32 %v204, 0.0
    %209 = vrot.lane.b32.xlu0 %v207, 126
    %v210 = vpop.permute.xlu0 %209
    %v212 = vadd.f32 %v207, %v210
    %v213 = vld [vmem:[%s2] sm:$0xff]
    %v214 = vld [vmem:[%s2 + $0x8] sm:$0xff]
    %v215 = vld [vmem:[%s2 + $0x10] sm:$0xff]
    %v216 = vld [vmem:[%s2 + $0x18] sm:$0xff]
    %vm217 = vcmask 64512
    %v219 = vsel %vm217, %v213, 0
    %v222 = vsel %vm217, %v214, 0
    %v225 = vsel %vm217, %v215, 0
    %v228 = vsel %vm217, %v216, 0
    %230 = vmatprep.subr.mxu0 0.0
    %231 = vmatpush1.msra.mxu0 %v212
    %232 = vmatprep.subr.mxu0 0.0
    %233 = vmatpush1.msra.mxu0 0.0
    %234 = vmatprep.subr.mxu0 0.0
    %235 = vmatpush1.msra.mxu0 0.0
    %236 = vmatprep.subr.mxu0 0.0
    %237 = vmatpush1.msra.mxu0 0.0
    %238 = vmatprep.subr.mxu0 0.0
    %239 = vmatpush1.msra.mxu0 0.0
    %240 = vmatprep.subr.mxu0 0.0
    %241 = vmatpush1.msra.mxu0 0.0
    %242 = vmatprep.subr.mxu0 0.0
    %243 = vmatpush1.msra.mxu0 0.0
    %244 = vmatprep.subr.mxu0 0.0
    %245 = vmatpush1.msra.mxu0 0.0
    %246 = vmatprep.subr.mxu0 0.0
    %247 = vmatpush1.msra.mxu0 0.0
    %248 = vmatprep.subr.mxu0 0.0
    %249 = vmatpush1.msra.mxu0 0.0
    %250 = vmatprep.subr.mxu0 0.0
    %251 = vmatpush1.msra.mxu0 0.0
    %252 = vmatprep.subr.mxu0 0.0
    %253 = vmatpush1.msra.mxu0 0.0
    %254 = vmatprep.subr.mxu0 0.0
    %255 = vmatpush1.msra.mxu0 0.0
    %256 = vmatprep.subr.mxu0 0.0
    %257 = vmatpush1.msra.mxu0 0.0
    %258 = vmatprep.subr.mxu0 0.0
    %259 = vmatpush1.msra.mxu0 0.0
    %260 = vmatprep.subr.mxu0 0.0
    %261 = vmatpush1.msra.mxu0 0.0
    %262 = vmatprep.subr.mxu0 0.0
    %263 = vmatpush1.msra.mxu0 0.0
    %264 = vmatprep.subr.mxu0 0.0
    %265 = vmatpush1.msra.mxu0 0.0
    %266 = vmatprep.subr.mxu0 0.0
    %267 = vmatpush1.msra.mxu0 0.0
    %268 = vmatprep.subr.mxu0 0.0
    %269 = vmatpush1.msra.mxu0 0.0
    %270 = vmatprep.subr.mxu0 0.0
    %271 = vmatpush1.msra.mxu0 0.0
    %272 = vmatprep.subr.mxu0 0.0
    %273 = vmatpush1.msra.mxu0 0.0
    %274 = vmatprep.subr.mxu0 0.0
    %275 = vmatpush1.msra.mxu0 0.0
    %276 = vmatprep.subr.mxu0 0.0
    %277 = vmatpush1.msra.mxu0 0.0
    %278 = vmatprep.subr.mxu0 0.0
    %279 = vmatpush1.msra.mxu0 0.0
    %280 = vmatprep.subr.mxu0 0.0
    %281 = vmatpush1.msra.mxu0 0.0
    %282 = vmatprep.subr.mxu0 0.0
    %283 = vmatpush1.msra.mxu0 0.0
    %284 = vmatprep.subr.mxu0 0.0
    %285 = vmatpush1.msra.mxu0 0.0
    %286 = vmatprep.subr.mxu0 0.0
    %287 = vmatpush1.msra.mxu0 0.0
    %288 = vmatprep.subr.mxu0 0.0
    %289 = vmatpush1.msra.mxu0 0.0
    %290 = vmatprep.subr.mxu0 0.0
    %291 = vmatpush1.msra.mxu0 0.0
    %292 = vmatprep.subr.mxu0 0.0
    %293 = vmatpush1.msra.mxu0 0.0
    %294 = vmatprep.mubr.f32.mxu0 0.0
    %295 = vmatmul.mubr.f32.gmra.mrb[0].mxu0 %v219
    %v296 = vpop.f32.mrb[0].mxu0
    %v297 = vadd.f32 0.0, %v296
    %v298 = vpop.f32.mrb[0].mxu0
    %299 = vmatprep.mubr.f32.mxu0 0.0
    %300 = vmatmul.mubr.f32.gmra.mrb[0].mxu0 %v222
    %v301 = vpop.f32.mrb[0].mxu0
    %v302 = vadd.f32 0.0, %v301
    %v303 = vpop.f32.mrb[0].mxu0
    %304 = vmatprep.mubr.f32.mxu0 0.0
    %305 = vmatmul.mubr.f32.gmra.mrb[0].mxu0 %v225
    %v306 = vpop.f32.mrb[0].mxu0
    %v307 = vadd.f32 0.0, %v306
    %v308 = vpop.f32.mrb[0].mxu0
    %309 = vmatprep.mubr.f32.mxu0 0.0
    %310 = vmatmul.mubr.f32.gmra.mrb[0].mxu0 %v228
    %v311 = vpop.f32.mrb[0].mxu0
    %v312 = vadd.f32 0.0, %v311
    %v313 = vpop.f32.mrb[0].mxu0
    %314 = vdwg.mxu0
    %v315 = vmul.f32 %v297, 0.5
    %v316 = vmul.f32 %v302, 0.5
    %v317 = vmul.f32 %v307, 0.5
    %v318 = vmul.f32 %v312, 0.5
    %v319 = vtanh.pop %v315
    %v320 = vtanh.pop %v316
    %v321 = vtanh.pop %v317
    %v322 = vtanh.pop %v318
    %v323 = vmul.f32 %v319, 0.5
    %v324 = vmul.f32 %v320, 0.5
    %v325 = vmul.f32 %v321, 0.5
    %v326 = vmul.f32 %v322, 0.5
    %v327 = vadd.f32 %v323, 0.5
    %v328 = vadd.f32 %v324, 0.5
    %v329 = vadd.f32 %v325, 0.5
    %v330 = vadd.f32 %v326, 0.5
    %331 = vst [vmem:[#allocation2] sm:$0xff] 0.0
    %vm332 = vcmask 830464
    %333 = vst.msk [vmem:[#allocation2 + $0x8] sm:$0xf] %vm332, 0.0
    %v334 = vld [vmem:[#allocation4] sm:$0xff]
    %v335 = vld [vmem:[#allocation4 + $0x8] sm:$0xff]
    %v336 = vld [vmem:[#allocation4 + $0x10] sm:$0xff]
    %v337 = vld [vmem:[#allocation4 + $0x18] sm:$0xff]
    %v338 = vld [vmem:[#allocation4 + $0x20] sm:$0xff]
    %v339 = vld [vmem:[#allocation4 + $0x28] sm:$0xff]
    %v340 = vld [vmem:[#allocation4 + $0x30] sm:$0xff]
    %v341 = vld [vmem:[#allocation4 + $0x38] sm:$0xff]
    %343 = vset.pattern.permute.xlu0 0
    %344 = vperm.xlu0 %343, %v327
    %v345 = vpop.permute.xlu0 %344
    %348 = vset.pattern.permute.xlu0 0
    %349 = vperm.xlu0 %348, %v328
    %v350 = vpop.permute.xlu0 %349
    %353 = vset.pattern.permute.xlu0 0
    %354 = vperm.xlu0 %353, %v329
    %v355 = vpop.permute.xlu0 %354
    %358 = vset.pattern.permute.xlu0 0
    %359 = vperm.xlu0 %358, %v330
    %v360 = vpop.permute.xlu0 %359
    %v362 = vmul.f32 %v334, %v345
    %v363 = vmul.f32 %v335, %v345
    %v364 = vmul.f32 %v336, %v350
    %v365 = vmul.f32 %v337, %v350
    %v366 = vmul.f32 %v338, %v355
    %v367 = vmul.f32 %v339, %v355
    %v368 = vmul.f32 %v340, %v360
    %v369 = vmul.f32 %v341, %v360
    %v370 = vadd.f32 %v362, %v364
    %v371 = vadd.f32 %v370, %v366
    %v372 = vadd.f32 %v371, %v368
    %v373 = vrot.slane %v372, 4
    %v374 = vadd.f32 %v372, %v373
    %v375 = vrot.slane %v374, 2
    %v376 = vadd.f32 %v374, %v375
    %v377 = vrot.slane %v376, 1
    %v378 = vadd.f32 %v376, %v377
    %v379 = vadd.f32 %v363, %v365
    %v380 = vadd.f32 %v379, %v367
    %v381 = vadd.f32 %v380, %v369
    %v382 = vrot.slane %v381, 4
    %v383 = vadd.f32 %v381, %v382
    %v384 = vrot.slane %v383, 2
    %v385 = vadd.f32 %v383, %v384
    %v386 = vrot.slane %v385, 1
    %v387 = vadd.f32 %v385, %v386
    %v388 = vmul.f32 %v378, 0.03125
    %v389 = vmul.f32 %v387, 0.03125
    %v392 = vcombine.low %v388, %v389
    %v394 = vunpack.c.l.s4 1966171168
    %v395 = vunpack.c.0.s8 %v394
    %v396 = vlaneseq
    %v397 = vshrl.u32 %v396, 7
    %v398 = vsub.s32 %v395, %v397
    %v399 = vrot.slane %v392, %v398
    %v401 = vunpack.c.l.s4 1966171168
    %v402 = vunpack.c.0.s8 %v401
    %v403 = vlaneseq
    %v404 = vshrl.u32 %v403, 7
    %v405 = vsub.s32 %v402, %v404
    %v406 = vrot.slane %v399, %v405
    %407 = vrot.lane.b32.xlu0 %v406, 51
    %v408 = vpop.permute.xlu0 %407
    %v409 = vrot.slane %v408, 7
    %vm410 = vcmask 416768
    %v411 = vsel %vm410, %v409, %v408
    %v413 = vlaneseq
    %vm414 = vcmp.ge.s32.totalorder %v413, 51
    %vm415 = vcmp.lt.s32.totalorder %v413, 307
    %vm416 = vmand %vm414, %vm415
    %417 = vst.msk [vmem:[#allocation2] ss:$4 sm:$0x7] %vm416, %v411
    %v418 = vmax.f32 %v362, %v366
    %v419 = vmax.f32 %v364, %v368
    %v420 = vmax.f32 %v418, %v419
    %v421 = vrot.slane %v420, 4
    %v422 = vmax.f32 %v420, %v421
    %v423 = vrot.slane %v422, 2
    %v424 = vmax.f32 %v422, %v423
    %v425 = vrot.slane %v424, 1
    %v426 = vmax.f32 %v424, %v425
    %v427 = vmax.f32 %v363, %v367
    %v428 = vmax.f32 %v365, %v369
    %v429 = vmax.f32 %v427, %v428
    %v430 = vrot.slane %v429, 4
    %v431 = vmax.f32 %v429, %v430
    %v432 = vrot.slane %v431, 2
    %v433 = vmax.f32 %v431, %v432
    %v434 = vrot.slane %v433, 1
    %v435 = vmax.f32 %v433, %v434
    %v438 = vcombine.low %v426, %v435
    %v440 = vunpack.c.l.s4 1966171168
    %v441 = vunpack.c.0.s8 %v440
    %v442 = vlaneseq
    %v443 = vshrl.u32 %v442, 7
    %v444 = vsub.s32 %v441, %v443
    %v445 = vrot.slane %v438, %v444
    %v447 = vunpack.c.l.s4 1966171168
    %v448 = vunpack.c.0.s8 %v447
    %v449 = vlaneseq
    %v450 = vshrl.u32 %v449, 7
    %v451 = vsub.s32 %v448, %v450
    %v452 = vrot.slane %v445, %v451
    %453 = vrot.lane.b32.xlu0 %v452, 51
    %v454 = vpop.permute.xlu0 %453
    %v455 = vrot.slane %v454, 7
    %v456 = vsel %vm410, %v455, %v454
    %s458 = scalar_lea.vmem [#allocation2], 2
    %459 = vst.msk [vmem:[%s458] ss:$4 sm:$0x7] %vm416, %v456
    %v460 = vld [vmem:[%s81] sm:$0xff]
    %v461 = vld [vmem:[%s81 + $0x8] sm:$0xff]
    %v462 = vld [vmem:[%s81 + $0x10] sm:$0xff]
    %v463 = vld [vmem:[%s81 + $0x18] sm:$0xff]
    %v464 = vld [vmem:[%s81 + $0x20] sm:$0xff]
    %v465 = vld [vmem:[%s81 + $0x28] sm:$0xff]
    %v466 = vld [vmem:[%s81 + $0x30] sm:$0xff]
    %v467 = vld [vmem:[%s81 + $0x38] sm:$0xff]
    %468 = vset.pattern.permute.xlu0 1
    %469 = vperm.xlu0 %468, %v327
    %v470 = vpop.permute.xlu0 %469
    %472 = vset.pattern.permute.xlu0 1
    %473 = vperm.xlu0 %472, %v328
    %v474 = vpop.permute.xlu0 %473
    %476 = vset.pattern.permute.xlu0 1
    %477 = vperm.xlu0 %476, %v329
    %v478 = vpop.permute.xlu0 %477
    %480 = vset.pattern.permute.xlu0 1
    %481 = vperm.xlu0 %480, %v330
    %v482 = vpop.permute.xlu0 %481
    %v484 = vmul.f32 %v460, %v470
    %v485 = vmul.f32 %v461, %v470
    %v486 = vmul.f32 %v462, %v474
    %v487 = vmul.f32 %v463, %v474
    %v488 = vmul.f32 %v464, %v478
    %v489 = vmul.f32 %v465, %v478
    %v490 = vmul.f32 %v466, %v482
    %v491 = vmul.f32 %v467, %v482
    %v492 = vadd.f32 %v484, %v486
    %v493 = vadd.f32 %v492, %v488
    %v494 = vadd.f32 %v493, %v490
    %v495 = vrot.slane %v494, 4
    %v496 = vadd.f32 %v494, %v495
    %v497 = vrot.slane %v496, 2
    %v498 = vadd.f32 %v496, %v497
    %v499 = vrot.slane %v498, 1
    %v500 = vadd.f32 %v498, %v499
    %v501 = vadd.f32 %v485, %v487
    %v502 = vadd.f32 %v501, %v489
    %v503 = vadd.f32 %v502, %v491
    %v504 = vrot.slane %v503, 4
    %v505 = vadd.f32 %v503, %v504
    %v506 = vrot.slane %v505, 2
    %v507 = vadd.f32 %v505, %v506
    %v508 = vrot.slane %v507, 1
    %v509 = vadd.f32 %v507, %v508
    %v510 = vmul.f32 %v500, 0.03125
    %v511 = vmul.f32 %v509, 0.03125
    %v514 = vcombine.low %v510, %v511
    %v516 = vunpack.c.l.s4 1966171168
    %v517 = vunpack.c.0.s8 %v516
    %v518 = vlaneseq
    %v519 = vshrl.u32 %v518, 7
    %v520 = vsub.s32 %v517, %v519
    %v521 = vrot.slane %v514, %v520
    %v523 = vunpack.c.l.s4 1966171168
    %v524 = vunpack.c.0.s8 %v523
    %v525 = vlaneseq
    %v526 = vshrl.u32 %v525, 7
    %v527 = vsub.s32 %v524, %v526
    %v528 = vrot.slane %v521, %v527
    %529 = vrot.lane.b32.xlu0 %v528, 51
    %v530 = vpop.permute.xlu0 %529
    %v531 = vrot.slane %v530, 7
    %v532 = vsel %vm410, %v531, %v530
    %s534 = scalar_lea.vmem [#allocation2], 1
    %535 = vst.msk [vmem:[%s534] ss:$4 sm:$0x7] %vm416, %v532
    %v536 = vmax.f32 %v484, %v488
    %v537 = vmax.f32 %v486, %v490
    %v538 = vmax.f32 %v536, %v537
    %v539 = vrot.slane %v538, 4
    %v540 = vmax.f32 %v538, %v539
    %v541 = vrot.slane %v540, 2
    %v542 = vmax.f32 %v540, %v541
    %v543 = vrot.slane %v542, 1
    %v544 = vmax.f32 %v542, %v543
    %v545 = vmax.f32 %v485, %v489
    %v546 = vmax.f32 %v487, %v491
    %v547 = vmax.f32 %v545, %v546
    %v548 = vrot.slane %v547, 4
    %v549 = vmax.f32 %v547, %v548
    %v550 = vrot.slane %v549, 2
    %v551 = vmax.f32 %v549, %v550
    %v552 = vrot.slane %v551, 1
    %v553 = vmax.f32 %v551, %v552
    %v556 = vcombine.low %v544, %v553
    %v558 = vunpack.c.l.s4 1966171168
    %v559 = vunpack.c.0.s8 %v558
    %v560 = vlaneseq
    %v561 = vshrl.u32 %v560, 7
    %v562 = vsub.s32 %v559, %v561
    %v563 = vrot.slane %v556, %v562
    %v565 = vunpack.c.l.s4 1966171168
    %v566 = vunpack.c.0.s8 %v565
    %v567 = vlaneseq
    %v568 = vshrl.u32 %v567, 7
    %v569 = vsub.s32 %v566, %v568
    %v570 = vrot.slane %v563, %v569
    %571 = vrot.lane.b32.xlu0 %v570, 51
    %v572 = vpop.permute.xlu0 %571
    %v573 = vrot.slane %v572, 7
    %v574 = vsel %vm410, %v573, %v572
    %s576 = scalar_lea.vmem [#allocation2], 3
    %577 = vst.msk [vmem:[%s576] ss:$4 sm:$0x7] %vm416, %v574
    %v578 = vld [vmem:[%s4] ss:$8 sm:$0x3]
    %s579 = scalar_lea.vmem %s4, 1
    %v580 = vld [vmem:[%s579] ss:$8 sm:$0x3]
    %s581 = scalar_lea.vmem %s4, 2
    %v582 = vld [vmem:[%s581] ss:$8 sm:$0x3]
    %s583 = scalar_lea.vmem %s4, 3
    %v584 = vld [vmem:[%s583] ss:$8 sm:$0x3]
    %s585 = scalar_lea.vmem %s4, 4
    %v586 = vld [vmem:[%s585] ss:$8 sm:$0x3]
    %s587 = scalar_lea.vmem %s4, 5
    %v588 = vld [vmem:[%s587] ss:$8 sm:$0x3]
    %s589 = scalar_lea.vmem %s4, 6
    %v590 = vld [vmem:[%s589] ss:$8 sm:$0x3]
    %v591 = vld [vmem:[#allocation2] sm:$0xff]
    %v592 = vld [vmem:[%s3] sm:$0xf]
    %v594 = vlaneseq
    %v595 = vshrl.u32 %v594, 7
    %v596 = vsub.s32 0, %v595
    %v597 = vrot.slane %v578, %v596
    %v598 = vlaneseq
    %v599 = vshrl.u32 %v598, 7
    %v600 = vsub.s32 1, %v599
    %v601 = vrot.slane %v578, %v600
    %v602 = vcombine.low %v597, %v601
    %v604 = vmul.f32 %v591, %v602
    %606 = vset.pattern.permute.xlu0 0
    %607 = vperm.xlu0 %606, %v592
    %v608 = vpop.permute.xlu0 %607
    %v610 = vunpack.c.l.s4 839922192
    %v611 = vunpack.c.0.s8 %v610
    %v612 = vlaneseq
    %v613 = vshrl.u32 %v612, 7
    %v614 = vsub.s32 %v611, %v613
    %v615 = vrot.slane %v608, %v614
    %v617 = vmul.f32 %v604, %v615
    %v618 = vadd.f32 %v617, 0.0
    %v619 = vld [vmem:[#allocation2] sm:$0xff]
    %v620 = vld [vmem:[#allocation2 + $0x8] sm:$0xf]
    %v621 = vld [vmem:[%s3] sm:$0xf]
    %v623 = vlaneseq
    %v624 = vshrl.u32 %v623, 7
    %v625 = vsub.s32 0, %v624
    %v626 = vrot.slane %v580, %v625
    %v627 = vlaneseq
    %v628 = vshrl.u32 %v627, 7
    %v629 = vsub.s32 1, %v628
    %v630 = vrot.slane %v580, %v629
    %v631 = vcombine.low %v626, %v630
    %632 = vrot.lane.b32.xlu0 %v631, 1
    %v633 = vpop.permute.xlu0 %632
    %v634 = vrot.slane %v633, 4
    %v635 = vsel %vm59, %v634, %v633
    %v638 = vmul.f32 %v619, %v635
    %v639 = vmul.f32 %v620, %v634
    %641 = vset.pattern.permute.xlu0 1
    %642 = vperm.xlu0 %641, %v621
    %v643 = vpop.permute.xlu0 %642
    %v645 = vunpack.c.l.s4 839922192
    %v646 = vunpack.c.0.s8 %v645
    %v647 = vlaneseq
    %v648 = vshrl.u32 %v647, 7
    %v649 = vsub.s32 %v646, %v648
    %v650 = vrot.slane %v643, %v649
    %v652 = vmul.f32 %v638, %v650
    %v653 = vmul.f32 %v639, %v650
    %656 = vrot.lane.b32.xlu0 %v652, 127
    %v657 = vpop.permute.xlu0 %656
    %658 = vrot.lane.b32.xlu0 %v653, 127
    %v659 = vpop.permute.xlu0 %658
    %v660 = vrot.slane %v657, 4
    %v661 = vrot.slane %v659, 4
    %vm662 = vcmask 1043456
    %v663 = vsel %vm662, %v660, %v661
    %vm664 = vcmask 1039360
    %v665 = vsel %vm664, %v657, %v663
    %v667 = vadd.f32 %v618, %v665
    %v668 = vld [vmem:[#allocation2] sm:$0xff]
    %v669 = vld [vmem:[#allocation2 + $0x8] sm:$0xf]
    %v670 = vld [vmem:[%s3] sm:$0xf]
    %v672 = vlaneseq
    %v673 = vshrl.u32 %v672, 7
    %v674 = vsub.s32 0, %v673
    %v675 = vrot.slane %v582, %v674
    %v676 = vlaneseq
    %v677 = vshrl.u32 %v676, 7
    %v678 = vsub.s32 1, %v677
    %v679 = vrot.slane %v582, %v678
    %v680 = vcombine.low %v675, %v679
    %681 = vrot.lane.b32.xlu0 %v680, 2
    %v682 = vpop.permute.xlu0 %681
    %v683 = vrot.slane %v682, 4
    %vm684 = vcmask 15360
    %v685 = vsel %vm684, %v683, %v682
    %v688 = vmul.f32 %v668, %v685
    %v689 = vmul.f32 %v669, %v683
    %691 = vset.pattern.permute.xlu0 2
    %692 = vperm.xlu0 %691, %v670
    %v693 = vpop.permute.xlu0 %692
    %v695 = vunpack.c.l.s4 839922192
    %v696 = vunpack.c.0.s8 %v695
    %v697 = vlaneseq
    %v698 = vshrl.u32 %v697, 7
    %v699 = vsub.s32 %v696, %v698
    %v700 = vrot.slane %v693, %v699
    %v702 = vmul.f32 %v688, %v700
    %v703 = vmul.f32 %v689, %v700
    %706 = vrot.lane.b32.xlu0 %v702, 126
    %v707 = vpop.permute.xlu0 %706
    %708 = vrot.lane.b32.xlu0 %v703, 126
    %v709 = vpop.permute.xlu0 %708
    %v710 = vrot.slane %v707, 4
    %v711 = vrot.slane %v709, 4
    %v712 = vsel %vm662, %v710, %v711
    %vm713 = vcmask 1031168
    %v714 = vsel %vm713, %v707, %v712
    %v716 = vadd.f32 %v667, %v714
    %v717 = vld [vmem:[#allocation2] sm:$0xff]
    %v718 = vld [vmem:[#allocation2 + $0x8] sm:$0xf]
    %v719 = vld [vmem:[%s3] sm:$0xf]
    %v721 = vlaneseq
    %v722 = vshrl.u32 %v721, 7
    %v723 = vsub.s32 0, %v722
    %v724 = vrot.slane %v584, %v723
    %v725 = vlaneseq
    %v726 = vshrl.u32 %v725, 7
    %v727 = vsub.s32 1, %v726
    %v728 = vrot.slane %v584, %v727
    %v729 = vcombine.low %v724, %v728
    %730 = vrot.lane.b32.xlu0 %v729, 3
    %v731 = vpop.permute.xlu0 %730
    %v732 = vrot.slane %v731, 4
    %vm733 = vcmask 23552
    %v734 = vsel %vm733, %v732, %v731
    %v737 = vmul.f32 %v717, %v734
    %v738 = vmul.f32 %v718, %v732
    %740 = vset.pattern.permute.xlu0 3
    %741 = vperm.xlu0 %740, %v719
    %v742 = vpop.permute.xlu0 %741
    %v744 = vunpack.c.l.s4 839922192
    %v745 = vunpack.c.0.s8 %v744
    %v746 = vlaneseq
    %v747 = vshrl.u32 %v746, 7
    %v748 = vsub.s32 %v745, %v747
    %v749 = vrot.slane %v742, %v748
    %v751 = vmul.f32 %v737, %v749
    %v752 = vmul.f32 %v738, %v749
    %755 = vrot.lane.b32.xlu0 %v751, 125
    %v756 = vpop.permute.xlu0 %755
    %757 = vrot.lane.b32.xlu0 %v752, 125
    %v758 = vpop.permute.xlu0 %757
    %v759 = vrot.slane %v756, 4
    %v760 = vrot.slane %v758, 4
    %v761 = vsel %vm662, %v759, %v760
    %vm762 = vcmask 1022976
    %v763 = vsel %vm762, %v756, %v761
    %v765 = vadd.f32 %v716, %v763
    %v766 = vld [vmem:[#allocation2] sm:$0xff]
    %v767 = vld [vmem:[#allocation2 + $0x8] sm:$0xf]
    %v768 = vld [vmem:[%s3] sm:$0xf]
    %v770 = vlaneseq
    %v771 = vshrl.u32 %v770, 7
    %v772 = vsub.s32 0, %v771
    %v773 = vrot.slane %v586, %v772
    %v774 = vlaneseq
    %v775 = vshrl.u32 %v774, 7
    %v776 = vsub.s32 1, %v775
    %v777 = vrot.slane %v586, %v776
    %v778 = vcombine.low %v773, %v777
    %779 = vrot.lane.b32.xlu0 %v778, 4
    %v780 = vpop.permute.xlu0 %779
    %v781 = vrot.slane %v780, 4
    %vm782 = vcmask 31744
    %v783 = vsel %vm782, %v781, %v780
    %v786 = vmul.f32 %v766, %v783
    %v787 = vmul.f32 %v767, %v781
    %789 = vset.pattern.permute.xlu0 4
    %790 = vperm.xlu0 %789, %v768
    %v791 = vpop.permute.xlu0 %790
    %v793 = vunpack.c.l.s4 839922192
    %v794 = vunpack.c.0.s8 %v793
    %v795 = vlaneseq
    %v796 = vshrl.u32 %v795, 7
    %v797 = vsub.s32 %v794, %v796
    %v798 = vrot.slane %v791, %v797
    %v800 = vmul.f32 %v786, %v798
    %v801 = vmul.f32 %v787, %v798
    %804 = vrot.lane.b32.xlu0 %v800, 124
    %v805 = vpop.permute.xlu0 %804
    %806 = vrot.lane.b32.xlu0 %v801, 124
    %v807 = vpop.permute.xlu0 %806
    %v808 = vrot.slane %v805, 4
    %v809 = vrot.slane %v807, 4
    %v810 = vsel %vm662, %v808, %v809
    %vm811 = vcmask 1014784
    %v812 = vsel %vm811, %v805, %v810
    %v814 = vadd.f32 %v765, %v812
    %v815 = vld [vmem:[#allocation2] sm:$0xff]
    %v816 = vld [vmem:[#allocation2 + $0x8] sm:$0xf]
    %v817 = vld [vmem:[%s3] sm:$0xf]
    %v819 = vlaneseq
    %v820 = vshrl.u32 %v819, 7
    %v821 = vsub.s32 0, %v820
    %v822 = vrot.slane %v588, %v821
    %v823 = vlaneseq
    %v824 = vshrl.u32 %v823, 7
    %v825 = vsub.s32 1, %v824
    %v826 = vrot.slane %v588, %v825
    %v827 = vcombine.low %v822, %v826
    %828 = vrot.lane.b32.xlu0 %v827, 5
    %v829 = vpop.permute.xlu0 %828
    %v830 = vrot.slane %v829, 4
    %vm831 = vcmask 39936
    %v832 = vsel %vm831, %v830, %v829
    %v835 = vmul.f32 %v815, %v832
    %v836 = vmul.f32 %v816, %v830
    %838 = vset.pattern.permute.xlu0 5
    %839 = vperm.xlu0 %838, %v817
    %v840 = vpop.permute.xlu0 %839
    %v842 = vunpack.c.l.s4 839922192
    %v843 = vunpack.c.0.s8 %v842
    %v844 = vlaneseq
    %v845 = vshrl.u32 %v844, 7
    %v846 = vsub.s32 %v843, %v845
    %v847 = vrot.slane %v840, %v846
    %v849 = vmul.f32 %v835, %v847
    %v850 = vmul.f32 %v836, %v847
    %853 = vrot.lane.b32.xlu0 %v849, 123
    %v854 = vpop.permute.xlu0 %853
    %855 = vrot.lane.b32.xlu0 %v850, 123
    %v856 = vpop.permute.xlu0 %855
    %v857 = vrot.slane %v854, 4
    %v858 = vrot.slane %v856, 4
    %v859 = vsel %vm662, %v857, %v858
    %vm860 = vcmask 1006592
    %v861 = vsel %vm860, %v854, %v859
    %v863 = vadd.f32 %v814, %v861
    %v864 = vld [vmem:[#allocation2] sm:$0xff]
    %v865 = vld [vmem:[#allocation2 + $0x8] sm:$0xf]
    %v866 = vld [vmem:[%s3] sm:$0xf]
    %v868 = vlaneseq
    %v869 = vshrl.u32 %v868, 7
    %v870 = vsub.s32 0, %v869
    %v871 = vrot.slane %v590, %v870
    %v872 = vlaneseq
    %v873 = vshrl.u32 %v872, 7
    %v874 = vsub.s32 1, %v873
    %v875 = vrot.slane %v590, %v874
    %v876 = vcombine.low %v871, %v875
    %877 = vrot.lane.b32.xlu0 %v876, 6
    %v878 = vpop.permute.xlu0 %877
    %v879 = vrot.slane %v878, 4
    %vm880 = vcmask 48128
    %v881 = vsel %vm880, %v879, %v878
    %v884 = vmul.f32 %v864, %v881
    %v885 = vmul.f32 %v865, %v879
    %887 = vset.pattern.permute.xlu0 6
    %888 = vperm.xlu0 %887, %v866
    %v889 = vpop.permute.xlu0 %888
    %v891 = vunpack.c.l.s4 839922192
    %v892 = vunpack.c.0.s8 %v891
    %v893 = vlaneseq
    %v894 = vshrl.u32 %v893, 7
    %v895 = vsub.s32 %v892, %v894
    %v896 = vrot.slane %v889, %v895
    %v898 = vmul.f32 %v884, %v896
    %v899 = vmul.f32 %v885, %v896
    %902 = vrot.lane.b32.xlu0 %v898, 122
    %v903 = vpop.permute.xlu0 %902
    %904 = vrot.lane.b32.xlu0 %v899, 122
    %v905 = vpop.permute.xlu0 %904
    %v906 = vrot.slane %v903, 4
    %v907 = vrot.slane %v905, 4
    %v908 = vsel %vm662, %v906, %v907
    %vm909 = vcmask 998400
    %v910 = vsel %vm909, %v903, %v908
    %v912 = vadd.f32 %v863, %v910
    %v913 = vld [vmem:[#allocation2] sm:$0xff]
    %v914 = vld [vmem:[#allocation2 + $0x8] sm:$0xf]
    %v915 = vld [vmem:[%s3] sm:$0xf]
    %916 = vrot.lane.b32.xlu0 %v602, 16
    %v917 = vpop.permute.xlu0 %916
    %v918 = vrot.slane %v917, 4
    %vm919 = vcmask 130048
    %v920 = vsel %vm919, %v918, %v917
    %v923 = vmul.f32 %v913, %v920
    %v924 = vmul.f32 %v914, %v918
    %926 = vset.pattern.permute.xlu0 7
    %927 = vperm.xlu0 %926, %v915
    %v928 = vpop.permute.xlu0 %927
    %v930 = vunpack.c.l.s4 839922192
    %v931 = vunpack.c.0.s8 %v930
    %v932 = vlaneseq
    %v933 = vshrl.u32 %v932, 7
    %v934 = vsub.s32 %v931, %v933
    %v935 = vrot.slane %v928, %v934
    %v937 = vmul.f32 %v923, %v935
    %v938 = vmul.f32 %v924, %v935
    %941 = vrot.lane.b32.xlu0 %v937, 112
    %v942 = vpop.permute.xlu0 %941
    %943 = vrot.lane.b32.xlu0 %v938, 112
    %v944 = vpop.permute.xlu0 %943
    %v945 = vrot.slane %v942, 4
    %v946 = vrot.slane %v944, 4
    %v947 = vsel %vm662, %v945, %v946
    %vm948 = vcmask 916480
    %v949 = vsel %vm948, %v942, %v947
    %v951 = vadd.f32 %v912, %v949
    %v952 = vld [vmem:[#allocation2] sm:$0xff]
    %v953 = vld [vmem:[#allocation2 + $0x8] sm:$0xf]
    %v954 = vld [vmem:[%s3] sm:$0xf]
    %955 = vrot.lane.b32.xlu0 %v631, 17
    %v956 = vpop.permute.xlu0 %955
    %v957 = vrot.slane %v956, 4
    %vm958 = vcmask 138240
    %v959 = vsel %vm958, %v957, %v956
    %v962 = vmul.f32 %v952, %v959
    %v963 = vmul.f32 %v953, %v957
    %965 = vset.pattern.permute.xlu0 8
    %966 = vperm.xlu0 %965, %v954
    %v967 = vpop.permute.xlu0 %966
    %v969 = vunpack.c.l.s4 839922192
    %v970 = vunpack.c.0.s8 %v969
    %v971 = vlaneseq
    %v972 = vshrl.u32 %v971, 7
    %v973 = vsub.s32 %v970, %v972
    %v974 = vrot.slane %v967, %v973
    %v976 = vmul.f32 %v962, %v974
    %v977 = vmul.f32 %v963, %v974
    %980 = vrot.lane.b32.xlu0 %v976, 111
    %v981 = vpop.permute.xlu0 %980
    %982 = vrot.lane.b32.xlu0 %v977, 111
    %v983 = vpop.permute.xlu0 %982
    %v984 = vrot.slane %v981, 4
    %v985 = vrot.slane %v983, 4
    %v986 = vsel %vm662, %v984, %v985
    %vm987 = vcmask 908288
    %v988 = vsel %vm987, %v981, %v986
    %v990 = vadd.f32 %v951, %v988
    %v991 = vld [vmem:[#allocation2] sm:$0xff]
    %v992 = vld [vmem:[#allocation2 + $0x8] sm:$0xf]
    %v993 = vld [vmem:[%s3] sm:$0xf]
    %994 = vrot.lane.b32.xlu0 %v680, 18
    %v995 = vpop.permute.xlu0 %994
    %v996 = vrot.slane %v995, 4
    %vm997 = vcmask 146432
    %v998 = vsel %vm997, %v996, %v995
    %v1001 = vmul.f32 %v991, %v998
    %v1002 = vmul.f32 %v992, %v996
    %1004 = vset.pattern.permute.xlu0 9
    %1005 = vperm.xlu0 %1004, %v993
    %v1006 = vpop.permute.xlu0 %1005
    %v1008 = vunpack.c.l.s4 839922192
    %v1009 = vunpack.c.0.s8 %v1008
    %v1010 = vlaneseq
    %v1011 = vshrl.u32 %v1010, 7
    %v1012 = vsub.s32 %v1009, %v1011
    %v1013 = vrot.slane %v1006, %v1012
    %v1015 = vmul.f32 %v1001, %v1013
    %v1016 = vmul.f32 %v1002, %v1013
    %1019 = vrot.lane.b32.xlu0 %v1015, 110
    %v1020 = vpop.permute.xlu0 %1019
    %1021 = vrot.lane.b32.xlu0 %v1016, 110
    %v1022 = vpop.permute.xlu0 %1021
    %v1023 = vrot.slane %v1020, 4
    %v1024 = vrot.slane %v1022, 4
    %v1025 = vsel %vm662, %v1023, %v1024
    %vm1026 = vcmask 900096
    %v1027 = vsel %vm1026, %v1020, %v1025
    %v1029 = vadd.f32 %v990, %v1027
    %v1030 = vld [vmem:[#allocation2] sm:$0xff]
    %v1031 = vld [vmem:[#allocation2 + $0x8] sm:$0xf]
    %v1032 = vld [vmem:[%s3] sm:$0xf]
    %1033 = vrot.lane.b32.xlu0 %v729, 19
    %v1034 = vpop.permute.xlu0 %1033
    %v1035 = vrot.slane %v1034, 4
    %vm1036 = vcmask 154624
    %v1037 = vsel %vm1036, %v1035, %v1034
    %v1040 = vmul.f32 %v1030, %v1037
    %v1041 = vmul.f32 %v1031, %v1035
    %1043 = vset.pattern.permute.xlu0 10
    %1044 = vperm.xlu0 %1043, %v1032
    %v1045 = vpop.permute.xlu0 %1044
    %v1047 = vunpack.c.l.s4 839922192
    %v1048 = vunpack.c.0.s8 %v1047
    %v1049 = vlaneseq
    %v1050 = vshrl.u32 %v1049, 7
    %v1051 = vsub.s32 %v1048, %v1050
    %v1052 = vrot.slane %v1045, %v1051
    %v1054 = vmul.f32 %v1040, %v1052
    %v1055 = vmul.f32 %v1041, %v1052
    %1058 = vrot.lane.b32.xlu0 %v1054, 109
    %v1059 = vpop.permute.xlu0 %1058
    %1060 = vrot.lane.b32.xlu0 %v1055, 109
    %v1061 = vpop.permute.xlu0 %1060
    %v1062 = vrot.slane %v1059, 4
    %v1063 = vrot.slane %v1061, 4
    %v1064 = vsel %vm662, %v1062, %v1063
    %vm1065 = vcmask 891904
    %v1066 = vsel %vm1065, %v1059, %v1064
    %v1068 = vadd.f32 %v1029, %v1066
    %v1069 = vld [vmem:[#allocation2] sm:$0xff]
    %v1070 = vld [vmem:[#allocation2 + $0x8] sm:$0xf]
    %v1071 = vld [vmem:[%s3] sm:$0xf]
    %1072 = vrot.lane.b32.xlu0 %v778, 20
    %v1073 = vpop.permute.xlu0 %1072
    %v1074 = vrot.slane %v1073, 4
    %vm1075 = vcmask 162816
    %v1076 = vsel %vm1075, %v1074, %v1073
    %v1079 = vmul.f32 %v1069, %v1076
    %v1080 = vmul.f32 %v1070, %v1074
    %1082 = vset.pattern.permute.xlu0 11
    %1083 = vperm.xlu0 %1082, %v1071
    %v1084 = vpop.permute.xlu0 %1083
    %v1086 = vunpack.c.l.s4 839922192
    %v1087 = vunpack.c.0.s8 %v1086
    %v1088 = vlaneseq
    %v1089 = vshrl.u32 %v1088, 7
    %v1090 = vsub.s32 %v1087, %v1089
    %v1091 = vrot.slane %v1084, %v1090
    %v1093 = vmul.f32 %v1079, %v1091
    %v1094 = vmul.f32 %v1080, %v1091
    %1097 = vrot.lane.b32.xlu0 %v1093, 108
    %v1098 = vpop.permute.xlu0 %1097
    %1099 = vrot.lane.b32.xlu0 %v1094, 108
    %v1100 = vpop.permute.xlu0 %1099
    %v1101 = vrot.slane %v1098, 4
    %v1102 = vrot.slane %v1100, 4
    %v1103 = vsel %vm662, %v1101, %v1102
    %vm1104 = vcmask 883712
    %v1105 = vsel %vm1104, %v1098, %v1103
    %v1107 = vadd.f32 %v1068, %v1105
    %v1108 = vld [vmem:[#allocation2] sm:$0xff]
    %v1109 = vld [vmem:[#allocation2 + $0x8] sm:$0xf]
    %v1110 = vld [vmem:[%s3] sm:$0xf]
    %1111 = vrot.lane.b32.xlu0 %v827, 21
    %v1112 = vpop.permute.xlu0 %1111
    %v1113 = vrot.slane %v1112, 4
    %vm1114 = vcmask 171008
    %v1115 = vsel %vm1114, %v1113, %v1112
    %v1118 = vmul.f32 %v1108, %v1115
    %v1119 = vmul.f32 %v1109, %v1113
    %1121 = vset.pattern.permute.xlu0 12
    %1122 = vperm.xlu0 %1121, %v1110
    %v1123 = vpop.permute.xlu0 %1122
    %v1125 = vunpack.c.l.s4 839922192
    %v1126 = vunpack.c.0.s8 %v1125
    %v1127 = vlaneseq
    %v1128 = vshrl.u32 %v1127, 7
    %v1129 = vsub.s32 %v1126, %v1128
    %v1130 = vrot.slane %v1123, %v1129
    %v1132 = vmul.f32 %v1118, %v1130
    %v1133 = vmul.f32 %v1119, %v1130
    %1136 = vrot.lane.b32.xlu0 %v1132, 107
    %v1137 = vpop.permute.xlu0 %1136
    %1138 = vrot.lane.b32.xlu0 %v1133, 107
    %v1139 = vpop.permute.xlu0 %1138
    %v1140 = vrot.slane %v1137, 4
    %v1141 = vrot.slane %v1139, 4
    %v1142 = vsel %vm662, %v1140, %v1141
    %vm1143 = vcmask 875520
    %v1144 = vsel %vm1143, %v1137, %v1142
    %v1146 = vadd.f32 %v1107, %v1144
    %v1147 = vld [vmem:[#allocation2] sm:$0xff]
    %v1148 = vld [vmem:[#allocation2 + $0x8] sm:$0xf]
    %v1149 = vld [vmem:[%s3] sm:$0xf]
    %1150 = vrot.lane.b32.xlu0 %v876, 22
    %v1151 = vpop.permute.xlu0 %1150
    %v1152 = vrot.slane %v1151, 4
    %vm1153 = vcmask 179200
    %v1154 = vsel %vm1153, %v1152, %v1151
    %v1157 = vmul.f32 %v1147, %v1154
    %v1158 = vmul.f32 %v1148, %v1152
    %1160 = vset.pattern.permute.xlu0 13
    %1161 = vperm.xlu0 %1160, %v1149
    %v1162 = vpop.permute.xlu0 %1161
    %v1164 = vunpack.c.l.s4 839922192
    %v1165 = vunpack.c.0.s8 %v1164
    %v1166 = vlaneseq
    %v1167 = vshrl.u32 %v1166, 7
    %v1168 = vsub.s32 %v1165, %v1167
    %v1169 = vrot.slane %v1162, %v1168
    %v1171 = vmul.f32 %v1157, %v1169
    %v1172 = vmul.f32 %v1158, %v1169
    %1175 = vrot.lane.b32.xlu0 %v1171, 106
    %v1176 = vpop.permute.xlu0 %1175
    %1177 = vrot.lane.b32.xlu0 %v1172, 106
    %v1178 = vpop.permute.xlu0 %1177
    %v1179 = vrot.slane %v1176, 4
    %v1180 = vrot.slane %v1178, 4
    %v1181 = vsel %vm662, %v1179, %v1180
    %vm1182 = vcmask 867328
    %v1183 = vsel %vm1182, %v1176, %v1181
    %v1185 = vadd.f32 %v1146, %v1183
    %v1186 = vld [vmem:[#allocation2] sm:$0xff]
    %v1187 = vld [vmem:[#allocation2 + $0x8] sm:$0xf]
    %v1188 = vld [vmem:[%s3] sm:$0xf]
    %1189 = vrot.lane.b32.xlu0 %v602, 32
    %v1190 = vpop.permute.xlu0 %1189
    %v1191 = vrot.slane %v1190, 4
    %v1192 = vsel %vm133, %v1191, %v1190
    %v1195 = vmul.f32 %v1186, %v1192
    %v1196 = vmul.f32 %v1187, %v1191
    %1198 = vset.pattern.permute.xlu0 14
    %1199 = vperm.xlu0 %1198, %v1188
    %v1200 = vpop.permute.xlu0 %1199
    %v1202 = vunpack.c.l.s4 839922192
    %v1203 = vunpack.c.0.s8 %v1202
    %v1204 = vlaneseq
    %v1205 = vshrl.u32 %v1204, 7
    %v1206 = vsub.s32 %v1203, %v1205
    %v1207 = vrot.slane %v1200, %v1206
    %v1209 = vmul.f32 %v1195, %v1207
    %v1210 = vmul.f32 %v1196, %v1207
    %1213 = vrot.lane.b32.xlu0 %v1209, 96
    %v1214 = vpop.permute.xlu0 %1213
    %1215 = vrot.lane.b32.xlu0 %v1210, 96
    %v1216 = vpop.permute.xlu0 %1215
    %v1217 = vrot.slane %v1214, 4
    %v1218 = vrot.slane %v1216, 4
    %v1219 = vsel %vm662, %v1217, %v1218
    %vm1220 = vcmask 785408
    %v1221 = vsel %vm1220, %v1214, %v1219
    %v1223 = vadd.f32 %v1185, %v1221
    %v1224 = vld [vmem:[#allocation2] sm:$0xff]
    %v1225 = vld [vmem:[#allocation2 + $0x8] sm:$0xf]
    %v1226 = vld [vmem:[%s3] sm:$0xf]
    %1227 = vrot.lane.b32.xlu0 %v631, 33
    %v1228 = vpop.permute.xlu0 %1227
    %v1229 = vrot.slane %v1228, 4
    %vm1230 = vcmask 269312
    %v1231 = vsel %vm1230, %v1229, %v1228
    %v1234 = vmul.f32 %v1224, %v1231
    %v1235 = vmul.f32 %v1225, %v1229
    %1237 = vset.pattern.permute.xlu0 15
    %1238 = vperm.xlu0 %1237, %v1226
    %v1239 = vpop.permute.xlu0 %1238
    %v1241 = vunpack.c.l.s4 839922192
    %v1242 = vunpack.c.0.s8 %v1241
    %v1243 = vlaneseq
    %v1244 = vshrl.u32 %v1243, 7
    %v1245 = vsub.s32 %v1242, %v1244
    %v1246 = vrot.slane %v1239, %v1245
    %v1248 = vmul.f32 %v1234, %v1246
    %v1249 = vmul.f32 %v1235, %v1246
    %1252 = vrot.lane.b32.xlu0 %v1248, 95
    %v1253 = vpop.permute.xlu0 %1252
    %1254 = vrot.lane.b32.xlu0 %v1249, 95
    %v1255 = vpop.permute.xlu0 %1254
    %v1256 = vrot.slane %v1253, 4
    %v1257 = vrot.slane %v1255, 4
    %v1258 = vsel %vm662, %v1256, %v1257
    %vm1259 = vcmask 777216
    %v1260 = vsel %vm1259, %v1253, %v1258
    %v1262 = vadd.f32 %v1223, %v1260
    %v1263 = vld [vmem:[#allocation2] sm:$0xff]
    %v1264 = vld [vmem:[#allocation2 + $0x8] sm:$0xf]
    %v1265 = vld [vmem:[%s3] sm:$0xf]
    %1266 = vrot.lane.b32.xlu0 %v680, 34
    %v1267 = vpop.permute.xlu0 %1266
    %v1268 = vrot.slane %v1267, 4
    %vm1269 = vcmask 277504
    %v1270 = vsel %vm1269, %v1268, %v1267
    %v1273 = vmul.f32 %v1263, %v1270
    %v1274 = vmul.f32 %v1264, %v1268
    %1276 = vset.pattern.permute.xlu0 16
    %1277 = vperm.xlu0 %1276, %v1265
    %v1278 = vpop.permute.xlu0 %1277
    %v1280 = vunpack.c.l.s4 839922192
    %v1281 = vunpack.c.0.s8 %v1280
    %v1282 = vlaneseq
    %v1283 = vshrl.u32 %v1282, 7
    %v1284 = vsub.s32 %v1281, %v1283
    %v1285 = vrot.slane %v1278, %v1284
    %v1287 = vmul.f32 %v1273, %v1285
    %v1288 = vmul.f32 %v1274, %v1285
    %1291 = vrot.lane.b32.xlu0 %v1287, 94
    %v1292 = vpop.permute.xlu0 %1291
    %1293 = vrot.lane.b32.xlu0 %v1288, 94
    %v1294 = vpop.permute.xlu0 %1293
    %v1295 = vrot.slane %v1292, 4
    %v1296 = vrot.slane %v1294, 4
    %v1297 = vsel %vm662, %v1295, %v1296
    %vm1298 = vcmask 769024
    %v1299 = vsel %vm1298, %v1292, %v1297
    %v1301 = vadd.f32 %v1262, %v1299
    %v1302 = vld [vmem:[#allocation2] sm:$0xff]
    %v1303 = vld [vmem:[#allocation2 + $0x8] sm:$0xf]
    %v1304 = vld [vmem:[%s3] sm:$0xf]
    %1305 = vrot.lane.b32.xlu0 %v729, 35
    %v1306 = vpop.permute.xlu0 %1305
    %v1307 = vrot.slane %v1306, 4
    %vm1308 = vcmask 285696
    %v1309 = vsel %vm1308, %v1307, %v1306
    %v1312 = vmul.f32 %v1302, %v1309
    %v1313 = vmul.f32 %v1303, %v1307
    %1315 = vset.pattern.permute.xlu0 17
    %1316 = vperm.xlu0 %1315, %v1304
    %v1317 = vpop.permute.xlu0 %1316
    %v1319 = vunpack.c.l.s4 839922192
    %v1320 = vunpack.c.0.s8 %v1319
    %v1321 = vlaneseq
    %v1322 = vshrl.u32 %v1321, 7
    %v1323 = vsub.s32 %v1320, %v1322
    %v1324 = vrot.slane %v1317, %v1323
    %v1326 = vmul.f32 %v1312, %v1324
    %v1327 = vmul.f32 %v1313, %v1324
    %1330 = vrot.lane.b32.xlu0 %v1326, 93
    %v1331 = vpop.permute.xlu0 %1330
    %1332 = vrot.lane.b32.xlu0 %v1327, 93
    %v1333 = vpop.permute.xlu0 %1332
    %v1334 = vrot.slane %v1331, 4
    %v1335 = vrot.slane %v1333, 4
    %v1336 = vsel %vm662, %v1334, %v1335
    %vm1337 = vcmask 760832
    %v1338 = vsel %vm1337, %v1331, %v1336
    %v1340 = vadd.f32 %v1301, %v1338
    %v1341 = vld [vmem:[#allocation2] sm:$0xff]
    %v1342 = vld [vmem:[#allocation2 + $0x8] sm:$0xf]
    %v1343 = vld [vmem:[%s3] sm:$0xf]
    %1344 = vrot.lane.b32.xlu0 %v778, 36
    %v1345 = vpop.permute.xlu0 %1344
    %v1346 = vrot.slane %v1345, 4
    %vm1347 = vcmask 293888
    %v1348 = vsel %vm1347, %v1346, %v1345
    %v1351 = vmul.f32 %v1341, %v1348
    %v1352 = vmul.f32 %v1342, %v1346
    %1354 = vset.pattern.permute.xlu0 18
    %1355 = vperm.xlu0 %1354, %v1343
    %v1356 = vpop.permute.xlu0 %1355
    %v1358 = vunpack.c.l.s4 839922192
    %v1359 = vunpack.c.0.s8 %v1358
    %v1360 = vlaneseq
    %v1361 = vshrl.u32 %v1360, 7
    %v1362 = vsub.s32 %v1359, %v1361
    %v1363 = vrot.slane %v1356, %v1362
    %v1365 = vmul.f32 %v1351, %v1363
    %v1366 = vmul.f32 %v1352, %v1363
    %1369 = vrot.lane.b32.xlu0 %v1365, 92
    %v1370 = vpop.permute.xlu0 %1369
    %1371 = vrot.lane.b32.xlu0 %v1366, 92
    %v1372 = vpop.permute.xlu0 %1371
    %v1373 = vrot.slane %v1370, 4
    %v1374 = vrot.slane %v1372, 4
    %v1375 = vsel %vm662, %v1373, %v1374
    %vm1376 = vcmask 752640
    %v1377 = vsel %vm1376, %v1370, %v1375
    %v1379 = vadd.f32 %v1340, %v1377
    %v1380 = vld [vmem:[#allocation2] sm:$0xff]
    %v1381 = vld [vmem:[#allocation2 + $0x8] sm:$0xf]
    %v1382 = vld [vmem:[%s3] sm:$0xf]
    %1383 = vrot.lane.b32.xlu0 %v827, 37
    %v1384 = vpop.permute.xlu0 %1383
    %v1385 = vrot.slane %v1384, 4
    %vm1386 = vcmask 302080
    %v1387 = vsel %vm1386, %v1385, %v1384
    %v1390 = vmul.f32 %v1380, %v1387
    %v1391 = vmul.f32 %v1381, %v1385
    %1393 = vset.pattern.permute.xlu0 19
    %1394 = vperm.xlu0 %1393, %v1382
    %v1395 = vpop.permute.xlu0 %1394
    %v1397 = vunpack.c.l.s4 839922192
    %v1398 = vunpack.c.0.s8 %v1397
    %v1399 = vlaneseq
    %v1400 = vshrl.u32 %v1399, 7
    %v1401 = vsub.s32 %v1398, %v1400
    %v1402 = vrot.slane %v1395, %v1401
    %v1404 = vmul.f32 %v1390, %v1402
    %v1405 = vmul.f32 %v1391, %v1402
    %1408 = vrot.lane.b32.xlu0 %v1404, 91
    %v1409 = vpop.permute.xlu0 %1408
    %1410 = vrot.lane.b32.xlu0 %v1405, 91
    %v1411 = vpop.permute.xlu0 %1410
    %v1412 = vrot.slane %v1409, 4
    %v1413 = vrot.slane %v1411, 4
    %v1414 = vsel %vm662, %v1412, %v1413
    %vm1415 = vcmask 744448
    %v1416 = vsel %vm1415, %v1409, %v1414
    %v1418 = vadd.f32 %v1379, %v1416
    %v1419 = vld [vmem:[#allocation2] sm:$0xff]
    %v1420 = vld [vmem:[#allocation2 + $0x8] sm:$0xf]
    %v1421 = vld [vmem:[%s3] sm:$0xf]
    %1422 = vrot.lane.b32.xlu0 %v876, 38
    %v1423 = vpop.permute.xlu0 %1422
    %v1424 = vrot.slane %v1423, 4
    %vm1425 = vcmask 310272
    %v1426 = vsel %vm1425, %v1424, %v1423
    %v1429 = vmul.f32 %v1419, %v1426
    %v1430 = vmul.f32 %v1420, %v1424
    %1432 = vset.pattern.permute.xlu0 20
    %1433 = vperm.xlu0 %1432, %v1421
    %v1434 = vpop.permute.xlu0 %1433
    %v1436 = vunpack.c.l.s4 839922192
    %v1437 = vunpack.c.0.s8 %v1436
    %v1438 = vlaneseq
    %v1439 = vshrl.u32 %v1438, 7
    %v1440 = vsub.s32 %v1437, %v1439
    %v1441 = vrot.slane %v1434, %v1440
    %v1443 = vmul.f32 %v1429, %v1441
    %v1444 = vmul.f32 %v1430, %v1441
    %1447 = vrot.lane.b32.xlu0 %v1443, 90
    %v1448 = vpop.permute.xlu0 %1447
    %1449 = vrot.lane.b32.xlu0 %v1444, 90
    %v1450 = vpop.permute.xlu0 %1449
    %v1451 = vrot.slane %v1448, 4
    %v1452 = vrot.slane %v1450, 4
    %v1453 = vsel %vm662, %v1451, %v1452
    %vm1454 = vcmask 736256
    %v1455 = vsel %vm1454, %v1448, %v1453
    %v1457 = vadd.f32 %v1418, %v1455
    %v1458 = vld [vmem:[#allocation2] sm:$0xff]
    %v1459 = vld [vmem:[#allocation2 + $0x8] sm:$0xf]
    %v1460 = vld [vmem:[%s3] sm:$0xf]
    %1461 = vrot.lane.b32.xlu0 %v602, 48
    %v1462 = vpop.permute.xlu0 %1461
    %v1463 = vrot.slane %v1462, 4
    %vm1464 = vcmask 392192
    %v1465 = vsel %vm1464, %v1463, %v1462
    %v1468 = vmul.f32 %v1458, %v1465
    %v1469 = vmul.f32 %v1459, %v1463
    %1471 = vset.pattern.permute.xlu0 21
    %1472 = vperm.xlu0 %1471, %v1460
    %v1473 = vpop.permute.xlu0 %1472
    %v1475 = vunpack.c.l.s4 839922192
    %v1476 = vunpack.c.0.s8 %v1475
    %v1477 = vlaneseq
    %v1478 = vshrl.u32 %v1477, 7
    %v1479 = vsub.s32 %v1476, %v1478
    %v1480 = vrot.slane %v1473, %v1479
    %v1482 = vmul.f32 %v1468, %v1480
    %v1483 = vmul.f32 %v1469, %v1480
    %1486 = vrot.lane.b32.xlu0 %v1482, 80
    %v1487 = vpop.permute.xlu0 %1486
    %1488 = vrot.lane.b32.xlu0 %v1483, 80
    %v1489 = vpop.permute.xlu0 %1488
    %v1490 = vrot.slane %v1487, 4
    %v1491 = vrot.slane %v1489, 4
    %v1492 = vsel %vm662, %v1490, %v1491
    %vm1493 = vcmask 654336
    %v1494 = vsel %vm1493, %v1487, %v1492
    %v1496 = vadd.f32 %v1457, %v1494
    %v1497 = vld [vmem:[#allocation2] sm:$0xff]
    %v1498 = vld [vmem:[#allocation2 + $0x8] sm:$0xf]
    %v1499 = vld [vmem:[%s3] sm:$0xf]
    %1500 = vrot.lane.b32.xlu0 %v631, 49
    %v1501 = vpop.permute.xlu0 %1500
    %v1502 = vrot.slane %v1501, 4
    %vm1503 = vcmask 400384
    %v1504 = vsel %vm1503, %v1502, %v1501
    %v1507 = vmul.f32 %v1497, %v1504
    %v1508 = vmul.f32 %v1498, %v1502
    %1510 = vset.pattern.permute.xlu0 22
    %1511 = vperm.xlu0 %1510, %v1499
    %v1512 = vpop.permute.xlu0 %1511
    %v1514 = vunpack.c.l.s4 839922192
    %v1515 = vunpack.c.0.s8 %v1514
    %v1516 = vlaneseq
    %v1517 = vshrl.u32 %v1516, 7
    %v1518 = vsub.s32 %v1515, %v1517
    %v1519 = vrot.slane %v1512, %v1518
    %v1521 = vmul.f32 %v1507, %v1519
    %v1522 = vmul.f32 %v1508, %v1519
    %1525 = vrot.lane.b32.xlu0 %v1521, 79
    %v1526 = vpop.permute.xlu0 %1525
    %1527 = vrot.lane.b32.xlu0 %v1522, 79
    %v1528 = vpop.permute.xlu0 %1527
    %v1529 = vrot.slane %v1526, 4
    %v1530 = vrot.slane %v1528, 4
    %v1531 = vsel %vm662, %v1529, %v1530
    %vm1532 = vcmask 646144
    %v1533 = vsel %vm1532, %v1526, %v1531
    %v1535 = vadd.f32 %v1496, %v1533
    %v1536 = vld [vmem:[#allocation2] sm:$0xff]
    %v1537 = vld [vmem:[#allocation2 + $0x8] sm:$0xf]
    %v1538 = vld [vmem:[%s3] sm:$0xf]
    %1539 = vrot.lane.b32.xlu0 %v680, 50
    %v1540 = vpop.permute.xlu0 %1539
    %v1541 = vrot.slane %v1540, 4
    %vm1542 = vcmask 408576
    %v1543 = vsel %vm1542, %v1541, %v1540
    %v1546 = vmul.f32 %v1536, %v1543
    %v1547 = vmul.f32 %v1537, %v1541
    %1549 = vset.pattern.permute.xlu0 23
    %1550 = vperm.xlu0 %1549, %v1538
    %v1551 = vpop.permute.xlu0 %1550
    %v1553 = vunpack.c.l.s4 839922192
    %v1554 = vunpack.c.0.s8 %v1553
    %v1555 = vlaneseq
    %v1556 = vshrl.u32 %v1555, 7
    %v1557 = vsub.s32 %v1554, %v1556
    %v1558 = vrot.slane %v1551, %v1557
    %v1560 = vmul.f32 %v1546, %v1558
    %v1561 = vmul.f32 %v1547, %v1558
    %1564 = vrot.lane.b32.xlu0 %v1560, 78
    %v1565 = vpop.permute.xlu0 %1564
    %1566 = vrot.lane.b32.xlu0 %v1561, 78
    %v1567 = vpop.permute.xlu0 %1566
    %v1568 = vrot.slane %v1565, 4
    %v1569 = vrot.slane %v1567, 4
    %v1570 = vsel %vm662, %v1568, %v1569
    %vm1571 = vcmask 637952
    %v1572 = vsel %vm1571, %v1565, %v1570
    %v1574 = vadd.f32 %v1535, %v1572
    %v1575 = vld [vmem:[#allocation2] sm:$0xff]
    %v1576 = vld [vmem:[#allocation2 + $0x8] sm:$0xf]
    %v1577 = vld [vmem:[%s3] sm:$0xf]
    %1578 = vrot.lane.b32.xlu0 %v729, 51
    %v1579 = vpop.permute.xlu0 %1578
    %v1580 = vrot.slane %v1579, 4
    %v1581 = vsel %vm410, %v1580, %v1579
    %v1584 = vmul.f32 %v1575, %v1581
    %v1585 = vmul.f32 %v1576, %v1580
    %1587 = vset.pattern.permute.xlu0 24
    %1588 = vperm.xlu0 %1587, %v1577
    %v1589 = vpop.permute.xlu0 %1588
    %v1591 = vunpack.c.l.s4 839922192
    %v1592 = vunpack.c.0.s8 %v1591
    %v1593 = vlaneseq
    %v1594 = vshrl.u32 %v1593, 7
    %v1595 = vsub.s32 %v1592, %v1594
    %v1596 = vrot.slane %v1589, %v1595
    %v1598 = vmul.f32 %v1584, %v1596
    %v1599 = vmul.f32 %v1585, %v1596
    %1602 = vrot.lane.b32.xlu0 %v1598, 77
    %v1603 = vpop.permute.xlu0 %1602
    %1604 = vrot.lane.b32.xlu0 %v1599, 77
    %v1605 = vpop.permute.xlu0 %1604
    %v1606 = vrot.slane %v1603, 4
    %v1607 = vrot.slane %v1605, 4
    %v1608 = vsel %vm662, %v1606, %v1607
    %vm1609 = vcmask 629760
    %v1610 = vsel %vm1609, %v1603, %v1608
    %v1612 = vadd.f32 %v1574, %v1610
    %v1613 = vld [vmem:[#allocation2] sm:$0xff]
    %v1614 = vld [vmem:[#allocation2 + $0x8] sm:$0xf]
    %v1615 = vld [vmem:[%s3] sm:$0xf]
    %1616 = vrot.lane.b32.xlu0 %v778, 52
    %v1617 = vpop.permute.xlu0 %1616
    %v1618 = vrot.slane %v1617, 4
    %vm1619 = vcmask 424960
    %v1620 = vsel %vm1619, %v1618, %v1617
    %v1623 = vmul.f32 %v1613, %v1620
    %v1624 = vmul.f32 %v1614, %v1618
    %1626 = vset.pattern.permute.xlu0 25
    %1627 = vperm.xlu0 %1626, %v1615
    %v1628 = vpop.permute.xlu0 %1627
    %v1630 = vunpack.c.l.s4 839922192
    %v1631 = vunpack.c.0.s8 %v1630
    %v1632 = vlaneseq
    %v1633 = vshrl.u32 %v1632, 7
    %v1634 = vsub.s32 %v1631, %v1633
    %v1635 = vrot.slane %v1628, %v1634
    %v1637 = vmul.f32 %v1623, %v1635
    %v1638 = vmul.f32 %v1624, %v1635
    %1641 = vrot.lane.b32.xlu0 %v1637, 76
    %v1642 = vpop.permute.xlu0 %1641
    %1643 = vrot.lane.b32.xlu0 %v1638, 76
    %v1644 = vpop.permute.xlu0 %1643
    %v1645 = vrot.slane %v1642, 4
    %v1646 = vrot.slane %v1644, 4
    %v1647 = vsel %vm662, %v1645, %v1646
    %vm1648 = vcmask 621568
    %v1649 = vsel %vm1648, %v1642, %v1647
    %v1651 = vadd.f32 %v1612, %v1649
    %v1652 = vld [vmem:[#allocation2] sm:$0xff]
    %v1653 = vld [vmem:[#allocation2 + $0x8] sm:$0xf]
    %v1654 = vld [vmem:[%s3] sm:$0xf]
    %1655 = vrot.lane.b32.xlu0 %v827, 53
    %v1656 = vpop.permute.xlu0 %1655
    %v1657 = vrot.slane %v1656, 4
    %vm1658 = vcmask 433152
    %v1659 = vsel %vm1658, %v1657, %v1656
    %v1662 = vmul.f32 %v1652, %v1659
    %v1663 = vmul.f32 %v1653, %v1657
    %1665 = vset.pattern.permute.xlu0 26
    %1666 = vperm.xlu0 %1665, %v1654
    %v1667 = vpop.permute.xlu0 %1666
    %v1669 = vunpack.c.l.s4 839922192
    %v1670 = vunpack.c.0.s8 %v1669
    %v1671 = vlaneseq
    %v1672 = vshrl.u32 %v1671, 7
    %v1673 = vsub.s32 %v1670, %v1672
    %v1674 = vrot.slane %v1667, %v1673
    %v1676 = vmul.f32 %v1662, %v1674
    %v1677 = vmul.f32 %v1663, %v1674
    %1680 = vrot.lane.b32.xlu0 %v1676, 75
    %v1681 = vpop.permute.xlu0 %1680
    %1682 = vrot.lane.b32.xlu0 %v1677, 75
    %v1683 = vpop.permute.xlu0 %1682
    %v1684 = vrot.slane %v1681, 4
    %v1685 = vrot.slane %v1683, 4
    %v1686 = vsel %vm662, %v1684, %v1685
    %vm1687 = vcmask 613376
    %v1688 = vsel %vm1687, %v1681, %v1686
    %v1690 = vadd.f32 %v1651, %v1688
    %v1691 = vld [vmem:[#allocation2] sm:$0xff]
    %v1692 = vld [vmem:[#allocation2 + $0x8] sm:$0xf]
    %v1693 = vld [vmem:[%s3] sm:$0xf]
    %1694 = vrot.lane.b32.xlu0 %v876, 54
    %v1695 = vpop.permute.xlu0 %1694
    %v1696 = vrot.slane %v1695, 4
    %vm1697 = vcmask 441344
    %v1698 = vsel %vm1697, %v1696, %v1695
    %v1701 = vmul.f32 %v1691, %v1698
    %v1702 = vmul.f32 %v1692, %v1696
    %1704 = vset.pattern.permute.xlu0 27
    %1705 = vperm.xlu0 %1704, %v1693
    %v1706 = vpop.permute.xlu0 %1705
    %v1708 = vunpack.c.l.s4 839922192
    %v1709 = vunpack.c.0.s8 %v1708
    %v1710 = vlaneseq
    %v1711 = vshrl.u32 %v1710, 7
    %v1712 = vsub.s32 %v1709, %v1711
    %v1713 = vrot.slane %v1706, %v1712
    %v1715 = vmul.f32 %v1701, %v1713
    %v1716 = vmul.f32 %v1702, %v1713
    %1719 = vrot.lane.b32.xlu0 %v1715, 74
    %v1720 = vpop.permute.xlu0 %1719
    %1721 = vrot.lane.b32.xlu0 %v1716, 74
    %v1722 = vpop.permute.xlu0 %1721
    %v1723 = vrot.slane %v1720, 4
    %v1724 = vrot.slane %v1722, 4
    %v1725 = vsel %vm662, %v1723, %v1724
    %vm1726 = vcmask 605184
    %v1727 = vsel %vm1726, %v1720, %v1725
    %v1729 = vadd.f32 %v1690, %v1727
    %v1730 = vld [vmem:[#allocation2] sm:$0xff]
    %v1731 = vld [vmem:[#allocation2 + $0x8] sm:$0xf]
    %v1732 = vld [vmem:[%s3] sm:$0xf]
    %1733 = vrot.lane.b32.xlu0 %v602, 64
    %v1734 = vpop.permute.xlu0 %1733
    %v1735 = vrot.slane %v1734, 4
    %vm1736 = vcmask 523264
    %v1737 = vsel %vm1736, %v1735, %v1734
    %v1740 = vmul.f32 %v1730, %v1737
    %v1741 = vmul.f32 %v1731, %v1735
    %1743 = vset.pattern.permute.xlu0 28
    %1744 = vperm.xlu0 %1743, %v1732
    %v1745 = vpop.permute.xlu0 %1744
    %v1747 = vunpack.c.l.s4 839922192
    %v1748 = vunpack.c.0.s8 %v1747
    %v1749 = vlaneseq
    %v1750 = vshrl.u32 %v1749, 7
    %v1751 = vsub.s32 %v1748, %v1750
    %v1752 = vrot.slane %v1745, %v1751
    %v1754 = vmul.f32 %v1740, %v1752
    %v1755 = vmul.f32 %v1741, %v1752
    %1758 = vrot.lane.b32.xlu0 %v1754, 64
    %v1759 = vpop.permute.xlu0 %1758
    %1760 = vrot.lane.b32.xlu0 %v1755, 64
    %v1761 = vpop.permute.xlu0 %1760
    %v1762 = vrot.slane %v1759, 4
    %v1763 = vrot.slane %v1761, 4
    %v1764 = vsel %vm662, %v1762, %v1763
    %v1765 = vsel %vm1736, %v1759, %v1764
    %v1767 = vadd.f32 %v1729, %v1765
    %v1768 = vld [vmem:[#allocation2] sm:$0xff]
    %v1769 = vld [vmem:[#allocation2 + $0x8] sm:$0xf]
    %v1770 = vld [vmem:[%s3] sm:$0xf]
    %1771 = vrot.lane.b32.xlu0 %v631, 65
    %v1772 = vpop.permute.xlu0 %1771
    %v1773 = vrot.slane %v1772, 4
    %vm1774 = vcmask 531456
    %v1775 = vsel %vm1774, %v1773, %v1772
    %v1778 = vmul.f32 %v1768, %v1775
    %v1779 = vmul.f32 %v1769, %v1773
    %1781 = vset.pattern.permute.xlu0 29
    %1782 = vperm.xlu0 %1781, %v1770
    %v1783 = vpop.permute.xlu0 %1782
    %v1785 = vunpack.c.l.s4 839922192
    %v1786 = vunpack.c.0.s8 %v1785
    %v1787 = vlaneseq
    %v1788 = vshrl.u32 %v1787, 7
    %v1789 = vsub.s32 %v1786, %v1788
    %v1790 = vrot.slane %v1783, %v1789
    %v1792 = vmul.f32 %v1778, %v1790
    %v1793 = vmul.f32 %v1779, %v1790
    %1796 = vrot.lane.b32.xlu0 %v1792, 63
    %v1797 = vpop.permute.xlu0 %1796
    %1798 = vrot.lane.b32.xlu0 %v1793, 63
    %v1799 = vpop.permute.xlu0 %1798
    %v1800 = vrot.slane %v1797, 4
    %v1801 = vrot.slane %v1799, 4
    %v1802 = vsel %vm662, %v1800, %v1801
    %vm1803 = vcmask 515072
    %v1804 = vsel %vm1803, %v1797, %v1802
    %v1806 = vadd.f32 %v1767, %v1804
    %v1807 = vld [vmem:[#allocation2] sm:$0xff]
    %v1808 = vld [vmem:[#allocation2 + $0x8] sm:$0xf]
    %v1809 = vld [vmem:[%s3] sm:$0xf]
    %1810 = vrot.lane.b32.xlu0 %v680, 66
    %v1811 = vpop.permute.xlu0 %1810
    %v1812 = vrot.slane %v1811, 4
    %vm1813 = vcmask 539648
    %v1814 = vsel %vm1813, %v1812, %v1811
    %v1817 = vmul.f32 %v1807, %v1814
    %v1818 = vmul.f32 %v1808, %v1812
    %1820 = vset.pattern.permute.xlu0 30
    %1821 = vperm.xlu0 %1820, %v1809
    %v1822 = vpop.permute.xlu0 %1821
    %v1824 = vunpack.c.l.s4 839922192
    %v1825 = vunpack.c.0.s8 %v1824
    %v1826 = vlaneseq
    %v1827 = vshrl.u32 %v1826, 7
    %v1828 = vsub.s32 %v1825, %v1827
    %v1829 = vrot.slane %v1822, %v1828
    %v1831 = vmul.f32 %v1817, %v1829
    %v1832 = vmul.f32 %v1818, %v1829
    %1835 = vrot.lane.b32.xlu0 %v1831, 62
    %v1836 = vpop.permute.xlu0 %1835
    %1837 = vrot.lane.b32.xlu0 %v1832, 62
    %v1838 = vpop.permute.xlu0 %1837
    %v1839 = vrot.slane %v1836, 4
    %v1840 = vrot.slane %v1838, 4
    %v1841 = vsel %vm662, %v1839, %v1840
    %vm1842 = vcmask 506880
    %v1843 = vsel %vm1842, %v1836, %v1841
    %v1845 = vadd.f32 %v1806, %v1843
    %v1846 = vld [vmem:[#allocation2] sm:$0xff]
    %v1847 = vld [vmem:[#allocation2 + $0x8] sm:$0xf]
    %v1848 = vld [vmem:[%s3] sm:$0xf]
    %1849 = vrot.lane.b32.xlu0 %v729, 67
    %v1850 = vpop.permute.xlu0 %1849
    %v1851 = vrot.slane %v1850, 4
    %vm1852 = vcmask 547840
    %v1853 = vsel %vm1852, %v1851, %v1850
    %v1856 = vmul.f32 %v1846, %v1853
    %v1857 = vmul.f32 %v1847, %v1851
    %1859 = vset.pattern.permute.xlu0 31
    %1860 = vperm.xlu0 %1859, %v1848
    %v1861 = vpop.permute.xlu0 %1860
    %v1863 = vunpack.c.l.s4 839922192
    %v1864 = vunpack.c.0.s8 %v1863
    %v1865 = vlaneseq
    %v1866 = vshrl.u32 %v1865, 7
    %v1867 = vsub.s32 %v1864, %v1866
    %v1868 = vrot.slane %v1861, %v1867
    %v1870 = vmul.f32 %v1856, %v1868
    %v1871 = vmul.f32 %v1857, %v1868
    %1874 = vrot.lane.b32.xlu0 %v1870, 61
    %v1875 = vpop.permute.xlu0 %1874
    %1876 = vrot.lane.b32.xlu0 %v1871, 61
    %v1877 = vpop.permute.xlu0 %1876
    %v1878 = vrot.slane %v1875, 4
    %v1879 = vrot.slane %v1877, 4
    %v1880 = vsel %vm662, %v1878, %v1879
    %vm1881 = vcmask 498688
    %v1882 = vsel %vm1881, %v1875, %v1880
    %v1884 = vadd.f32 %v1845, %v1882
    %v1885 = vld [vmem:[#allocation2] sm:$0xff]
    %v1886 = vld [vmem:[#allocation2 + $0x8] sm:$0xf]
    %v1887 = vld [vmem:[%s3] sm:$0xf]
    %1888 = vrot.lane.b32.xlu0 %v778, 68
    %v1889 = vpop.permute.xlu0 %1888
    %v1890 = vrot.slane %v1889, 4
    %vm1891 = vcmask 556032
    %v1892 = vsel %vm1891, %v1890, %v1889
    %v1895 = vmul.f32 %v1885, %v1892
    %v1896 = vmul.f32 %v1886, %v1890
    %1898 = vset.pattern.permute.xlu0 32
    %1899 = vperm.xlu0 %1898, %v1887
    %v1900 = vpop.permute.xlu0 %1899
    %v1902 = vunpack.c.l.s4 839922192
    %v1903 = vunpack.c.0.s8 %v1902
    %v1904 = vlaneseq
    %v1905 = vshrl.u32 %v1904, 7
    %v1906 = vsub.s32 %v1903, %v1905
    %v1907 = vrot.slane %v1900, %v1906
    %v1909 = vmul.f32 %v1895, %v1907
    %v1910 = vmul.f32 %v1896, %v1907
    %1913 = vrot.lane.b32.xlu0 %v1909, 60
    %v1914 = vpop.permute.xlu0 %1913
    %1915 = vrot.lane.b32.xlu0 %v1910, 60
    %v1916 = vpop.permute.xlu0 %1915
    %v1917 = vrot.slane %v1914, 4
    %v1918 = vrot.slane %v1916, 4
    %v1919 = vsel %vm662, %v1917, %v1918
    %vm1920 = vcmask 490496
    %v1921 = vsel %vm1920, %v1914, %v1919
    %v1923 = vadd.f32 %v1884, %v1921
    %v1924 = vld [vmem:[#allocation2] sm:$0xff]
    %v1925 = vld [vmem:[#allocation2 + $0x8] sm:$0xf]
    %v1926 = vld [vmem:[%s3] sm:$0xf]
    %1927 = vrot.lane.b32.xlu0 %v827, 69
    %v1928 = vpop.permute.xlu0 %1927
    %v1929 = vrot.slane %v1928, 4
    %vm1930 = vcmask 564224
    %v1931 = vsel %vm1930, %v1929, %v1928
    %v1934 = vmul.f32 %v1924, %v1931
    %v1935 = vmul.f32 %v1925, %v1929
    %1937 = vset.pattern.permute.xlu0 33
    %1938 = vperm.xlu0 %1937, %v1926
    %v1939 = vpop.permute.xlu0 %1938
    %v1941 = vunpack.c.l.s4 839922192
    %v1942 = vunpack.c.0.s8 %v1941
    %v1943 = vlaneseq
    %v1944 = vshrl.u32 %v1943, 7
    %v1945 = vsub.s32 %v1942, %v1944
    %v1946 = vrot.slane %v1939, %v1945
    %v1948 = vmul.f32 %v1934, %v1946
    %v1949 = vmul.f32 %v1935, %v1946
    %1952 = vrot.lane.b32.xlu0 %v1948, 59
    %v1953 = vpop.permute.xlu0 %1952
    %1954 = vrot.lane.b32.xlu0 %v1949, 59
    %v1955 = vpop.permute.xlu0 %1954
    %v1956 = vrot.slane %v1953, 4
    %v1957 = vrot.slane %v1955, 4
    %v1958 = vsel %vm662, %v1956, %v1957
    %vm1959 = vcmask 482304
    %v1960 = vsel %vm1959, %v1953, %v1958
    %v1962 = vadd.f32 %v1923, %v1960
    %v1963 = vld [vmem:[#allocation2] sm:$0xff]
    %v1964 = vld [vmem:[#allocation2 + $0x8] sm:$0xf]
    %v1965 = vld [vmem:[%s3] sm:$0xf]
    %1966 = vrot.lane.b32.xlu0 %v876, 70
    %v1967 = vpop.permute.xlu0 %1966
    %v1968 = vrot.slane %v1967, 4
    %vm1969 = vcmask 572416
    %v1970 = vsel %vm1969, %v1968, %v1967
    %v1973 = vmul.f32 %v1963, %v1970
    %v1974 = vmul.f32 %v1964, %v1968
    %1976 = vset.pattern.permute.xlu0 34
    %1977 = vperm.xlu0 %1976, %v1965
    %v1978 = vpop.permute.xlu0 %1977
    %v1980 = vunpack.c.l.s4 839922192
    %v1981 = vunpack.c.0.s8 %v1980
    %v1982 = vlaneseq
    %v1983 = vshrl.u32 %v1982, 7
    %v1984 = vsub.s32 %v1981, %v1983
    %v1985 = vrot.slane %v1978, %v1984
    %v1987 = vmul.f32 %v1973, %v1985
    %v1988 = vmul.f32 %v1974, %v1985
    %1991 = vrot.lane.b32.xlu0 %v1987, 58
    %v1992 = vpop.permute.xlu0 %1991
    %1993 = vrot.lane.b32.xlu0 %v1988, 58
    %v1994 = vpop.permute.xlu0 %1993
    %v1995 = vrot.slane %v1992, 4
    %v1996 = vrot.slane %v1994, 4
    %v1997 = vsel %vm662, %v1995, %v1996
    %vm1998 = vcmask 474112
    %v1999 = vsel %vm1998, %v1992, %v1997
    %v2001 = vadd.f32 %v1962, %v1999
    %v2002 = vld [vmem:[#allocation2] sm:$0xff]
    %v2003 = vld [vmem:[#allocation2 + $0x8] sm:$0xf]
    %v2004 = vld [vmem:[%s3] sm:$0xf]
    %2005 = vrot.lane.b32.xlu0 %v602, 80
    %v2006 = vpop.permute.xlu0 %2005
    %v2007 = vrot.slane %v2006, 4
    %v2008 = vsel %vm1493, %v2007, %v2006
    %v2011 = vmul.f32 %v2002, %v2008
    %v2012 = vmul.f32 %v2003, %v2007
    %2014 = vset.pattern.permute.xlu0 35
    %2015 = vperm.xlu0 %2014, %v2004
    %v2016 = vpop.permute.xlu0 %2015
    %v2018 = vunpack.c.l.s4 839922192
    %v2019 = vunpack.c.0.s8 %v2018
    %v2020 = vlaneseq
    %v2021 = vshrl.u32 %v2020, 7
    %v2022 = vsub.s32 %v2019, %v2021
    %v2023 = vrot.slane %v2016, %v2022
    %v2025 = vmul.f32 %v2011, %v2023
    %v2026 = vmul.f32 %v2012, %v2023
    %2029 = vrot.lane.b32.xlu0 %v2025, 48
    %v2030 = vpop.permute.xlu0 %2029
    %2031 = vrot.lane.b32.xlu0 %v2026, 48
    %v2032 = vpop.permute.xlu0 %2031
    %v2033 = vrot.slane %v2030, 4
    %v2034 = vrot.slane %v2032, 4
    %v2035 = vsel %vm662, %v2033, %v2034
    %v2036 = vsel %vm1464, %v2030, %v2035
    %v2038 = vadd.f32 %v2001, %v2036
    %v2039 = vld [vmem:[#allocation2] sm:$0xff]
    %v2040 = vld [vmem:[#allocation2 + $0x8] sm:$0xf]
    %v2041 = vld [vmem:[%s3] sm:$0xf]
    %2042 = vrot.lane.b32.xlu0 %v631, 81
    %v2043 = vpop.permute.xlu0 %2042
    %v2044 = vrot.slane %v2043, 4
    %vm2045 = vcmask 662528
    %v2046 = vsel %vm2045, %v2044, %v2043
    %v2049 = vmul.f32 %v2039, %v2046
    %v2050 = vmul.f32 %v2040, %v2044
    %2052 = vset.pattern.permute.xlu0 36
    %2053 = vperm.xlu0 %2052, %v2041
    %v2054 = vpop.permute.xlu0 %2053
    %v2056 = vunpack.c.l.s4 839922192
    %v2057 = vunpack.c.0.s8 %v2056
    %v2058 = vlaneseq
    %v2059 = vshrl.u32 %v2058, 7
    %v2060 = vsub.s32 %v2057, %v2059
    %v2061 = vrot.slane %v2054, %v2060
    %v2063 = vmul.f32 %v2049, %v2061
    %v2064 = vmul.f32 %v2050, %v2061
    %2067 = vrot.lane.b32.xlu0 %v2063, 47
    %v2068 = vpop.permute.xlu0 %2067
    %2069 = vrot.lane.b32.xlu0 %v2064, 47
    %v2070 = vpop.permute.xlu0 %2069
    %v2071 = vrot.slane %v2068, 4
    %v2072 = vrot.slane %v2070, 4
    %v2073 = vsel %vm662, %v2071, %v2072
    %vm2074 = vcmask 384000
    %v2075 = vsel %vm2074, %v2068, %v2073
    %v2077 = vadd.f32 %v2038, %v2075
    %v2078 = vld [vmem:[#allocation2] sm:$0xff]
    %v2079 = vld [vmem:[#allocation2 + $0x8] sm:$0xf]
    %v2080 = vld [vmem:[%s3] sm:$0xf]
    %2081 = vrot.lane.b32.xlu0 %v680, 82
    %v2082 = vpop.permute.xlu0 %2081
    %v2083 = vrot.slane %v2082, 4
    %vm2084 = vcmask 670720
    %v2085 = vsel %vm2084, %v2083, %v2082
    %v2088 = vmul.f32 %v2078, %v2085
    %v2089 = vmul.f32 %v2079, %v2083
    %2091 = vset.pattern.permute.xlu0 37
    %2092 = vperm.xlu0 %2091, %v2080
    %v2093 = vpop.permute.xlu0 %2092
    %v2095 = vunpack.c.l.s4 839922192
    %v2096 = vunpack.c.0.s8 %v2095
    %v2097 = vlaneseq
    %v2098 = vshrl.u32 %v2097, 7
    %v2099 = vsub.s32 %v2096, %v2098
    %v2100 = vrot.slane %v2093, %v2099
    %v2102 = vmul.f32 %v2088, %v2100
    %v2103 = vmul.f32 %v2089, %v2100
    %2106 = vrot.lane.b32.xlu0 %v2102, 46
    %v2107 = vpop.permute.xlu0 %2106
    %2108 = vrot.lane.b32.xlu0 %v2103, 46
    %v2109 = vpop.permute.xlu0 %2108
    %v2110 = vrot.slane %v2107, 4
    %v2111 = vrot.slane %v2109, 4
    %v2112 = vsel %vm662, %v2110, %v2111
    %vm2113 = vcmask 375808
    %v2114 = vsel %vm2113, %v2107, %v2112
    %v2116 = vadd.f32 %v2077, %v2114
    %v2117 = vld [vmem:[#allocation2] sm:$0xff]
    %v2118 = vld [vmem:[#allocation2 + $0x8] sm:$0xf]
    %v2119 = vld [vmem:[%s3] sm:$0xf]
    %2120 = vrot.lane.b32.xlu0 %v729, 83
    %v2121 = vpop.permute.xlu0 %2120
    %v2122 = vrot.slane %v2121, 4
    %vm2123 = vcmask 678912
    %v2124 = vsel %vm2123, %v2122, %v2121
    %v2127 = vmul.f32 %v2117, %v2124
    %v2128 = vmul.f32 %v2118, %v2122
    %2130 = vset.pattern.permute.xlu0 38
    %2131 = vperm.xlu0 %2130, %v2119
    %v2132 = vpop.permute.xlu0 %2131
    %v2134 = vunpack.c.l.s4 839922192
    %v2135 = vunpack.c.0.s8 %v2134
    %v2136 = vlaneseq
    %v2137 = vshrl.u32 %v2136, 7
    %v2138 = vsub.s32 %v2135, %v2137
    %v2139 = vrot.slane %v2132, %v2138
    %v2141 = vmul.f32 %v2127, %v2139
    %v2142 = vmul.f32 %v2128, %v2139
    %2145 = vrot.lane.b32.xlu0 %v2141, 45
    %v2146 = vpop.permute.xlu0 %2145
    %2147 = vrot.lane.b32.xlu0 %v2142, 45
    %v2148 = vpop.permute.xlu0 %2147
    %v2149 = vrot.slane %v2146, 4
    %v2150 = vrot.slane %v2148, 4
    %v2151 = vsel %vm662, %v2149, %v2150
    %vm2152 = vcmask 367616
    %v2153 = vsel %vm2152, %v2146, %v2151
    %v2155 = vadd.f32 %v2116, %v2153
    %v2156 = vld [vmem:[#allocation2] sm:$0xff]
    %v2157 = vld [vmem:[#allocation2 + $0x8] sm:$0xf]
    %v2158 = vld [vmem:[%s3] sm:$0xf]
    %2159 = vrot.lane.b32.xlu0 %v778, 84
    %v2160 = vpop.permute.xlu0 %2159
    %v2161 = vrot.slane %v2160, 4
    %vm2162 = vcmask 687104
    %v2163 = vsel %vm2162, %v2161, %v2160
    %v2166 = vmul.f32 %v2156, %v2163
    %v2167 = vmul.f32 %v2157, %v2161
    %2169 = vset.pattern.permute.xlu0 39
    %2170 = vperm.xlu0 %2169, %v2158
    %v2171 = vpop.permute.xlu0 %2170
    %v2173 = vunpack.c.l.s4 839922192
    %v2174 = vunpack.c.0.s8 %v2173
    %v2175 = vlaneseq
    %v2176 = vshrl.u32 %v2175, 7
    %v2177 = vsub.s32 %v2174, %v2176
    %v2178 = vrot.slane %v2171, %v2177
    %v2180 = vmul.f32 %v2166, %v2178
    %v2181 = vmul.f32 %v2167, %v2178
    %2184 = vrot.lane.b32.xlu0 %v2180, 44
    %v2185 = vpop.permute.xlu0 %2184
    %2186 = vrot.lane.b32.xlu0 %v2181, 44
    %v2187 = vpop.permute.xlu0 %2186
    %v2188 = vrot.slane %v2185, 4
    %v2189 = vrot.slane %v2187, 4
    %v2190 = vsel %vm662, %v2188, %v2189
    %vm2191 = vcmask 359424
    %v2192 = vsel %vm2191, %v2185, %v2190
    %v2194 = vadd.f32 %v2155, %v2192
    %v2195 = vld [vmem:[#allocation2] sm:$0xff]
    %v2196 = vld [vmem:[#allocation2 + $0x8] sm:$0xf]
    %v2197 = vld [vmem:[%s3] sm:$0xf]
    %2198 = vrot.lane.b32.xlu0 %v827, 85
    %v2199 = vpop.permute.xlu0 %2198
    %v2200 = vrot.slane %v2199, 4
    %vm2201 = vcmask 695296
    %v2202 = vsel %vm2201, %v2200, %v2199
    %v2205 = vmul.f32 %v2195, %v2202
    %v2206 = vmul.f32 %v2196, %v2200
    %2208 = vset.pattern.permute.xlu0 40
    %2209 = vperm.xlu0 %2208, %v2197
    %v2210 = vpop.permute.xlu0 %2209
    %v2212 = vunpack.c.l.s4 839922192
    %v2213 = vunpack.c.0.s8 %v2212
    %v2214 = vlaneseq
    %v2215 = vshrl.u32 %v2214, 7
    %v2216 = vsub.s32 %v2213, %v2215
    %v2217 = vrot.slane %v2210, %v2216
    %v2219 = vmul.f32 %v2205, %v2217
    %v2220 = vmul.f32 %v2206, %v2217
    %2223 = vrot.lane.b32.xlu0 %v2219, 43
    %v2224 = vpop.permute.xlu0 %2223
    %2225 = vrot.lane.b32.xlu0 %v2220, 43
    %v2226 = vpop.permute.xlu0 %2225
    %v2227 = vrot.slane %v2224, 4
    %v2228 = vrot.slane %v2226, 4
    %v2229 = vsel %vm662, %v2227, %v2228
    %vm2230 = vcmask 351232
    %v2231 = vsel %vm2230, %v2224, %v2229
    %v2233 = vadd.f32 %v2194, %v2231
    %v2234 = vld [vmem:[#allocation2] sm:$0xff]
    %v2235 = vld [vmem:[#allocation2 + $0x8] sm:$0xf]
    %v2236 = vld [vmem:[%s3] sm:$0xf]
    %2237 = vrot.lane.b32.xlu0 %v876, 86
    %v2238 = vpop.permute.xlu0 %2237
    %v2239 = vrot.slane %v2238, 4
    %vm2240 = vcmask 703488
    %v2241 = vsel %vm2240, %v2239, %v2238
    %v2244 = vmul.f32 %v2234, %v2241
    %v2245 = vmul.f32 %v2235, %v2239
    %2247 = vset.pattern.permute.xlu0 41
    %2248 = vperm.xlu0 %2247, %v2236
    %v2249 = vpop.permute.xlu0 %2248
    %v2251 = vunpack.c.l.s4 839922192
    %v2252 = vunpack.c.0.s8 %v2251
    %v2253 = vlaneseq
    %v2254 = vshrl.u32 %v2253, 7
    %v2255 = vsub.s32 %v2252, %v2254
    %v2256 = vrot.slane %v2249, %v2255
    %v2258 = vmul.f32 %v2244, %v2256
    %v2259 = vmul.f32 %v2245, %v2256
    %2262 = vrot.lane.b32.xlu0 %v2258, 42
    %v2263 = vpop.permute.xlu0 %2262
    %2264 = vrot.lane.b32.xlu0 %v2259, 42
    %v2265 = vpop.permute.xlu0 %2264
    %v2266 = vrot.slane %v2263, 4
    %v2267 = vrot.slane %v2265, 4
    %v2268 = vsel %vm662, %v2266, %v2267
    %vm2269 = vcmask 343040
    %v2270 = vsel %vm2269, %v2263, %v2268
    %v2272 = vadd.f32 %v2233, %v2270
    %v2273 = vld [vmem:[#allocation2] sm:$0xff]
    %v2274 = vld [vmem:[#allocation2 + $0x8] sm:$0xf]
    %v2275 = vld [vmem:[%s3] sm:$0xf]
    %2276 = vrot.lane.b32.xlu0 %v602, 96
    %v2277 = vpop.permute.xlu0 %2276
    %v2278 = vrot.slane %v2277, 4
    %v2279 = vsel %vm1220, %v2278, %v2277
    %v2282 = vmul.f32 %v2273, %v2279
    %v2283 = vmul.f32 %v2274, %v2278
    %2285 = vset.pattern.permute.xlu0 42
    %2286 = vperm.xlu0 %2285, %v2275
    %v2287 = vpop.permute.xlu0 %2286
    %v2289 = vunpack.c.l.s4 839922192
    %v2290 = vunpack.c.0.s8 %v2289
    %v2291 = vlaneseq
    %v2292 = vshrl.u32 %v2291, 7
    %v2293 = vsub.s32 %v2290, %v2292
    %v2294 = vrot.slane %v2287, %v2293
    %v2296 = vmul.f32 %v2282, %v2294
    %v2297 = vmul.f32 %v2283, %v2294
    %2300 = vrot.lane.b32.xlu0 %v2296, 32
    %v2301 = vpop.permute.xlu0 %2300
    %2302 = vrot.lane.b32.xlu0 %v2297, 32
    %v2303 = vpop.permute.xlu0 %2302
    %v2304 = vrot.slane %v2301, 4
    %v2305 = vrot.slane %v2303, 4
    %v2306 = vsel %vm662, %v2304, %v2305
    %v2307 = vsel %vm133, %v2301, %v2306
    %v2309 = vadd.f32 %v2272, %v2307
    %v2310 = vld [vmem:[#allocation2] sm:$0xff]
    %v2311 = vld [vmem:[#allocation2 + $0x8] sm:$0xf]
    %v2312 = vld [vmem:[%s3] sm:$0xf]
    %2313 = vrot.lane.b32.xlu0 %v631, 97
    %v2314 = vpop.permute.xlu0 %2313
    %v2315 = vrot.slane %v2314, 4
    %vm2316 = vcmask 793600
    %v2317 = vsel %vm2316, %v2315, %v2314
    %v2320 = vmul.f32 %v2310, %v2317
    %v2321 = vmul.f32 %v2311, %v2315
    %2323 = vset.pattern.permute.xlu0 43
    %2324 = vperm.xlu0 %2323, %v2312
    %v2325 = vpop.permute.xlu0 %2324
    %v2327 = vunpack.c.l.s4 839922192
    %v2328 = vunpack.c.0.s8 %v2327
    %v2329 = vlaneseq
    %v2330 = vshrl.u32 %v2329, 7
    %v2331 = vsub.s32 %v2328, %v2330
    %v2332 = vrot.slane %v2325, %v2331
    %v2334 = vmul.f32 %v2320, %v2332
    %v2335 = vmul.f32 %v2321, %v2332
    %2338 = vrot.lane.b32.xlu0 %v2334, 31
    %v2339 = vpop.permute.xlu0 %2338
    %2340 = vrot.lane.b32.xlu0 %v2335, 31
    %v2341 = vpop.permute.xlu0 %2340
    %v2342 = vrot.slane %v2339, 4
    %v2343 = vrot.slane %v2341, 4
    %v2344 = vsel %vm662, %v2342, %v2343
    %vm2345 = vcmask 252928
    %v2346 = vsel %vm2345, %v2339, %v2344
    %v2348 = vadd.f32 %v2309, %v2346
    %v2349 = vld [vmem:[#allocation2] sm:$0xff]
    %v2350 = vld [vmem:[#allocation2 + $0x8] sm:$0xf]
    %v2351 = vld [vmem:[%s3] sm:$0xf]
    %2352 = vrot.lane.b32.xlu0 %v680, 98
    %v2353 = vpop.permute.xlu0 %2352
    %v2354 = vrot.slane %v2353, 4
    %vm2355 = vcmask 801792
    %v2356 = vsel %vm2355, %v2354, %v2353
    %v2359 = vmul.f32 %v2349, %v2356
    %v2360 = vmul.f32 %v2350, %v2354
    %2362 = vset.pattern.permute.xlu0 44
    %2363 = vperm.xlu0 %2362, %v2351
    %v2364 = vpop.permute.xlu0 %2363
    %v2366 = vunpack.c.l.s4 839922192
    %v2367 = vunpack.c.0.s8 %v2366
    %v2368 = vlaneseq
    %v2369 = vshrl.u32 %v2368, 7
    %v2370 = vsub.s32 %v2367, %v2369
    %v2371 = vrot.slane %v2364, %v2370
    %v2373 = vmul.f32 %v2359, %v2371
    %v2374 = vmul.f32 %v2360, %v2371
    %2377 = vrot.lane.b32.xlu0 %v2373, 30
    %v2378 = vpop.permute.xlu0 %2377
    %2379 = vrot.lane.b32.xlu0 %v2374, 30
    %v2380 = vpop.permute.xlu0 %2379
    %v2381 = vrot.slane %v2378, 4
    %v2382 = vrot.slane %v2380, 4
    %v2383 = vsel %vm662, %v2381, %v2382
    %vm2384 = vcmask 244736
    %v2385 = vsel %vm2384, %v2378, %v2383
    %v2387 = vadd.f32 %v2348, %v2385
    %v2388 = vld [vmem:[#allocation2] sm:$0xff]
    %v2389 = vld [vmem:[#allocation2 + $0x8] sm:$0xf]
    %v2390 = vld [vmem:[%s3] sm:$0xf]
    %2391 = vrot.lane.b32.xlu0 %v729, 99
    %v2392 = vpop.permute.xlu0 %2391
    %v2393 = vrot.slane %v2392, 4
    %vm2394 = vcmask 809984
    %v2395 = vsel %vm2394, %v2393, %v2392
    %v2398 = vmul.f32 %v2388, %v2395
    %v2399 = vmul.f32 %v2389, %v2393
    %2401 = vset.pattern.permute.xlu0 45
    %2402 = vperm.xlu0 %2401, %v2390
    %v2403 = vpop.permute.xlu0 %2402
    %v2405 = vunpack.c.l.s4 839922192
    %v2406 = vunpack.c.0.s8 %v2405
    %v2407 = vlaneseq
    %v2408 = vshrl.u32 %v2407, 7
    %v2409 = vsub.s32 %v2406, %v2408
    %v2410 = vrot.slane %v2403, %v2409
    %v2412 = vmul.f32 %v2398, %v2410
    %v2413 = vmul.f32 %v2399, %v2410
    %2416 = vrot.lane.b32.xlu0 %v2412, 29
    %v2417 = vpop.permute.xlu0 %2416
    %2418 = vrot.lane.b32.xlu0 %v2413, 29
    %v2419 = vpop.permute.xlu0 %2418
    %v2420 = vrot.slane %v2417, 4
    %v2421 = vrot.slane %v2419, 4
    %v2422 = vsel %vm662, %v2420, %v2421
    %vm2423 = vcmask 236544
    %v2424 = vsel %vm2423, %v2417, %v2422
    %v2426 = vadd.f32 %v2387, %v2424
    %v2427 = vld [vmem:[#allocation2] sm:$0xff]
    %v2428 = vld [vmem:[#allocation2 + $0x8] sm:$0xf]
    %v2429 = vld [vmem:[%s3] sm:$0xf]
    %2430 = vrot.lane.b32.xlu0 %v778, 100
    %v2431 = vpop.permute.xlu0 %2430
    %v2432 = vrot.slane %v2431, 4
    %vm2433 = vcmask 818176
    %v2434 = vsel %vm2433, %v2432, %v2431
    %v2437 = vmul.f32 %v2427, %v2434
    %v2438 = vmul.f32 %v2428, %v2432
    %2440 = vset.pattern.permute.xlu0 46
    %2441 = vperm.xlu0 %2440, %v2429
    %v2442 = vpop.permute.xlu0 %2441
    %v2444 = vunpack.c.l.s4 839922192
    %v2445 = vunpack.c.0.s8 %v2444
    %v2446 = vlaneseq
    %v2447 = vshrl.u32 %v2446, 7
    %v2448 = vsub.s32 %v2445, %v2447
    %v2449 = vrot.slane %v2442, %v2448
    %v2451 = vmul.f32 %v2437, %v2449
    %v2452 = vmul.f32 %v2438, %v2449
    %2455 = vrot.lane.b32.xlu0 %v2451, 28
    %v2456 = vpop.permute.xlu0 %2455
    %2457 = vrot.lane.b32.xlu0 %v2452, 28
    %v2458 = vpop.permute.xlu0 %2457
    %v2459 = vrot.slane %v2456, 4
    %v2460 = vrot.slane %v2458, 4
    %v2461 = vsel %vm662, %v2459, %v2460
    %vm2462 = vcmask 228352
    %v2463 = vsel %vm2462, %v2456, %v2461
    %v2465 = vadd.f32 %v2426, %v2463
    %v2466 = vld [vmem:[#allocation2] sm:$0xff]
    %v2467 = vld [vmem:[#allocation2 + $0x8] sm:$0xf]
    %v2468 = vld [vmem:[%s3] sm:$0xf]
    %2469 = vrot.lane.b32.xlu0 %v827, 101
    %v2470 = vpop.permute.xlu0 %2469
    %v2471 = vrot.slane %v2470, 4
    %vm2472 = vcmask 826368
    %v2473 = vsel %vm2472, %v2471, %v2470
    %v2476 = vmul.f32 %v2466, %v2473
    %v2477 = vmul.f32 %v2467, %v2471
    %2479 = vset.pattern.permute.xlu0 47
    %2480 = vperm.xlu0 %2479, %v2468
    %v2481 = vpop.permute.xlu0 %2480
    %v2483 = vunpack.c.l.s4 839922192
    %v2484 = vunpack.c.0.s8 %v2483
    %v2485 = vlaneseq
    %v2486 = vshrl.u32 %v2485, 7
    %v2487 = vsub.s32 %v2484, %v2486
    %v2488 = vrot.slane %v2481, %v2487
    %v2490 = vmul.f32 %v2476, %v2488
    %v2491 = vmul.f32 %v2477, %v2488
    %2494 = vrot.lane.b32.xlu0 %v2490, 27
    %v2495 = vpop.permute.xlu0 %2494
    %2496 = vrot.lane.b32.xlu0 %v2491, 27
    %v2497 = vpop.permute.xlu0 %2496
    %v2498 = vrot.slane %v2495, 4
    %v2499 = vrot.slane %v2497, 4
    %v2500 = vsel %vm662, %v2498, %v2499
    %vm2501 = vcmask 220160
    %v2502 = vsel %vm2501, %v2495, %v2500
    %v2504 = vadd.f32 %v2465, %v2502
    %v2505 = vld [vmem:[#allocation2] sm:$0xff]
    %v2506 = vld [vmem:[#allocation2 + $0x8] sm:$0xf]
    %v2507 = vld [vmem:[%s3] sm:$0xf]
    %2508 = vrot.lane.b32.xlu0 %v876, 102
    %v2509 = vpop.permute.xlu0 %2508
    %v2510 = vrot.slane %v2509, 4
    %vm2511 = vcmask 834560
    %v2512 = vsel %vm2511, %v2510, %v2509
    %v2515 = vmul.f32 %v2505, %v2512
    %v2516 = vmul.f32 %v2506, %v2510
    %2518 = vset.pattern.permute.xlu0 48
    %2519 = vperm.xlu0 %2518, %v2507
    %v2520 = vpop.permute.xlu0 %2519
    %v2522 = vunpack.c.l.s4 839922192
    %v2523 = vunpack.c.0.s8 %v2522
    %v2524 = vlaneseq
    %v2525 = vshrl.u32 %v2524, 7
    %v2526 = vsub.s32 %v2523, %v2525
    %v2527 = vrot.slane %v2520, %v2526
    %v2529 = vmul.f32 %v2515, %v2527
    %v2530 = vmul.f32 %v2516, %v2527
    %2533 = vrot.lane.b32.xlu0 %v2529, 26
    %v2534 = vpop.permute.xlu0 %2533
    %2535 = vrot.lane.b32.xlu0 %v2530, 26
    %v2536 = vpop.permute.xlu0 %2535
    %v2537 = vrot.slane %v2534, 4
    %v2538 = vrot.slane %v2536, 4
    %v2539 = vsel %vm662, %v2537, %v2538
    %vm2540 = vcmask 211968
    %v2541 = vsel %vm2540, %v2534, %v2539
    %v2543 = vadd.f32 %v2504, %v2541
    %v2545 = vrot.slane %v2543, 6
    %v2546 = vrot.slane %v2545, 4
    %v2548 = vadd.f32 %v2543, %v2546
    %v2549 = vmul.f32 %v2548, 0.5
    %v2550 = vtanh.pop %v2549
    %v2551 = vmul.f32 %v2550, 0.5
    %v2552 = vadd.f32 %v2551, 0.5
    %v2554 = vlaneseq
    %v2555 = vshrl.u32 %v2554, 7
    %v2556 = vsub.s32 0, %v2555
    %v2557 = vrot.slane %v2552, %v2556
    %v2558 = vlaneseq
    %v2559 = vshrl.u32 %v2558, 7
    %v2560 = vsub.s32 4, %v2559
    %v2561 = vrot.slane %v2552, %v2560
    %v2564 = vlaneseq
    %v2565 = vshrl.u32 %v2564, 7
    %v2566 = vsub.s32 0, %v2565
    %v2567 = vrot.slane %v2557, %v2566
    %v2568 = vlaneseq
    %v2569 = vshrl.u32 %v2568, 7
    %v2570 = vsub.s32 0, %v2569
    %v2571 = vrot.slane %v2561, %v2570
    %v2572 = vmul.f32 %v362, %v2567
    %v2573 = vmul.f32 %v363, %v2571
    %v2574 = vmul.f32 %v364, %v2567
    %v2575 = vmul.f32 %v365, %v2571
    %v2576 = vmul.f32 %v366, %v2567
    %v2577 = vmul.f32 %v367, %v2571
    %v2578 = vmul.f32 %v368, %v2567
    %v2579 = vmul.f32 %v369, %v2571
    %2580 = vst [vmem:[#allocation7] sm:$0xff] %v2572
    %2581 = vst [vmem:[#allocation7 + $0x8] sm:$0xff] %v2573
    %2582 = vst [vmem:[#allocation7 + $0x10] sm:$0xff] %v2574
    %2583 = vst [vmem:[#allocation7 + $0x18] sm:$0xff] %v2575
    %2584 = vst [vmem:[#allocation7 + $0x20] sm:$0xff] %v2576
    %2585 = vst [vmem:[#allocation7 + $0x28] sm:$0xff] %v2577
    %2586 = vst [vmem:[#allocation7 + $0x30] sm:$0xff] %v2578
    %2587 = vst [vmem:[#allocation7 + $0x38] sm:$0xff] %v2579
    %v2588 = vlaneseq
    %v2589 = vshrl.u32 %v2588, 7
    %v2590 = vsub.s32 1, %v2589
    %v2591 = vrot.slane %v2552, %v2590
    %v2592 = vlaneseq
    %v2593 = vshrl.u32 %v2592, 7
    %v2594 = vsub.s32 5, %v2593
    %v2595 = vrot.slane %v2552, %v2594
    %v2598 = vlaneseq
    %v2599 = vshrl.u32 %v2598, 7
    %v2600 = vsub.s32 1, %v2599
    %v2601 = vrot.slane %v2591, %v2600
    %v2602 = vlaneseq
    %v2603 = vshrl.u32 %v2602, 7
    %v2604 = vsub.s32 1, %v2603
    %v2605 = vrot.slane %v2595, %v2604
    %v2606 = vmul.f32 %v484, %v2601
    %v2607 = vmul.f32 %v485, %v2605
    %v2608 = vmul.f32 %v486, %v2601
    %v2609 = vmul.f32 %v487, %v2605
    %v2610 = vmul.f32 %v488, %v2601
    %v2611 = vmul.f32 %v489, %v2605
    %v2612 = vmul.f32 %v490, %v2601
    %v2613 = vmul.f32 %v491, %v2605
    %s2614 = scalar_lea.vmem [#allocation7], 64
    %2615 = vst [vmem:[%s2614] sm:$0xff] %v2606
    %2616 = vst [vmem:[%s2614 + $0x8] sm:$0xff] %v2607
    %2617 = vst [vmem:[%s2614 + $0x10] sm:$0xff] %v2608
    %2618 = vst [vmem:[%s2614 + $0x18] sm:$0xff] %v2609
    %2619 = vst [vmem:[%s2614 + $0x20] sm:$0xff] %v2610
    %2620 = vst [vmem:[%s2614 + $0x28] sm:$0xff] %v2611
    %2621 = vst [vmem:[%s2614 + $0x30] sm:$0xff] %v2612
    %2622 = vst [vmem:[%s2614 + $0x38] sm:$0xff] %v2613
    // Predicated region
    $region26: #{tpu_custom_call.1} parent=1 // pred_check
      _
    $region27: #{tpu_custom_call.1} parent=1 // pred_check_branch
      %2624 = sbr.rel (0) target = $region29
    $region28: #{tpu_custom_call.1} parent=1 // pred_region
      %s2626 = ssub.s32 2048, 2048
      %2627 = vsyncadd [#allocation6], %s2626
      %s2628 = sshll.u32 [#allocation7], 4
      %s2629 = int_to_ptr.vmem [resolvable:$true] %s2628
      %2634 = dma.vmem_to_hbm [thread:$0]  %s2629, 2048, %s5, [#allocation6], 256, 256, 16
    $region29: #{tpu_custom_call.1} parent=1 // pred_fallthru
      _
    // Predicated region
    $region30: #{tpu_custom_call.1} parent=1 // pred_check
      _
    $region31: #{tpu_custom_call.1} parent=1 // pred_check_branch
      %2636 = sbr.rel (0) target = $region33
    $region32: #{tpu_custom_call.1} parent=1 // pred_region
      %2637 = dma.done [#allocation6], 2048
    $region33: #{tpu_custom_call.1} parent=1 // pred_fallthru
      _
    %2638 = vsyncpa [#allocation5], 1
    %2639 = vsyncpa [#allocation6], 1

</llo_original>
